<compile_context>
chip_gen: v7x
topology: tpu7x:2x2x1
jax: 0.10.0
libtpu: 0.0.40
codegen_flags: <defaults>
</compile_context>

<pallas_src>
import functools
import math

import jax
import jax.numpy as jnp
from jax import lax
from jax.experimental import pallas as pl
from jax.experimental.pallas import tpu as pltpu


def _flash_attn_kernel(q_ref, k_ref, v_ref, o_ref,
                       q_sc, m_sc, l_sc, acc_sc, *, scale):
    kv = pl.program_id(2)

    @pl.when(kv == 0)
    def _():
        # Hoist q scaling out of the kv loop: scale in f32 once per q tile,
        # store back in the input dtype so the MXU sees native operands.
        q_sc[...] = (q_ref[0].astype(jnp.float32) * scale).astype(q_sc.dtype)
        m_sc[...] = jnp.full_like(m_sc, -jnp.inf)
        l_sc[...] = jnp.zeros_like(l_sc)
        acc_sc[...] = jnp.zeros_like(acc_sc)

    q = q_sc[...]          # (tq, D), pre-scaled, input dtype
    k = k_ref[0]           # (tk, D), input dtype
    v = v_ref[0]           # (tk, D), input dtype

    # QK^T as a last-dim contraction on both operands: maps straight onto the
    # MXU with f32 accumulation, no transpose of the K tile.
    s = lax.dot_general(
        q, k,
        dimension_numbers=(((1,), (1,)), ((), ())),
        preferred_element_type=jnp.float32,
    )                      # (tq, tk) f32

    m_prev = m_sc[...]                                       # (tq, 1)
    m_new = jnp.maximum(m_prev, s.max(axis=-1, keepdims=True))
    alpha = jnp.exp(m_prev - m_new)                          # correction factor
    p = jnp.exp(s - m_new)                                   # (tq, tk) f32

    l_sc[...] = alpha * l_sc[...] + p.sum(axis=-1, keepdims=True)
    acc_sc[...] = alpha * acc_sc[...] + jnp.dot(
        p.astype(v.dtype), v, preferred_element_type=jnp.float32
    )
    m_sc[...] = m_new

    @pl.when(kv == pl.num_programs(2) - 1)
    def _():
        inv_l = pl.reciprocal(l_sc[...], approx=True)        # EUP slot, ~free
        o_ref[0] = (acc_sc[...] * inv_l).astype(o_ref.dtype)


def mmdit_attention(q, k, v, *, tq=256, tk=512):
    """Equivalent of MMDiTAttention.forward (non-causal, no dropout)."""
    B, H, Sq, D = q.shape
    _, _, Sk, _ = k.shape
    tq = min(tq, Sq)
    tk = min(tk, Sk)
    assert Sq % tq == 0 and Sk % tk == 0, "seq lengths must tile evenly (pad upstream)"

    scale = 1.0 / math.sqrt(D)

    qf = q.reshape(B * H, Sq, D)
    kf = k.reshape(B * H, Sk, D)
    vf = v.reshape(B * H, Sk, D)

    kernel = functools.partial(_flash_attn_kernel, scale=scale)

    # TODO(synk): optional lane-dense 2-heads-per-step layout (acc/out as
    # (tq, 2*D)=128 lanes) to avoid masked stores for D=64; gate on bundle evidence.
    out = pl.pallas_call(
        kernel,
        out_shape=jax.ShapeDtypeStruct((B * H, Sq, D), q.dtype),
        grid_spec=pltpu.PrefetchScalarGridSpec(
            num_scalar_prefetch=0,
            grid=(B * H, Sq // tq, Sk // tk),
            in_specs=[
                pl.BlockSpec((1, tq, D), lambda b, i, j: (b, i, 0)),
                pl.BlockSpec((1, tk, D), lambda b, i, j: (b, j, 0)),
                pl.BlockSpec((1, tk, D), lambda b, i, j: (b, j, 0)),
            ],
            out_specs=pl.BlockSpec((1, tq, D), lambda b, i, j: (b, i, 0)),
            scratch_shapes=[
                pltpu.VMEM((tq, D), q.dtype),        # pre-scaled q tile
                pltpu.VMEM((tq, 1), jnp.float32),    # running max
                pltpu.VMEM((tq, 1), jnp.float32),    # running denom
                pltpu.VMEM((tq, D), jnp.float32),    # running numerator
            ],
        ),
        compiler_params=pltpu.CompilerParams(
            dimension_semantics=("parallel", "parallel", "arbitrary"),
        ),
    )(qf, kf, vf)

    return out.reshape(B, H, Sq, D)


def _reference_attention(q, k, v):
    scale = 1.0 / math.sqrt(q.shape[-1])
    s = jnp.einsum(
        "bhqd,bhkd->bhqk", q.astype(jnp.float32), k.astype(jnp.float32)
    ) * scale
    p = jax.nn.softmax(s, axis=-1)
    return jnp.einsum("bhqk,bhkd->bhqd", p, v.astype(jnp.float32)).astype(q.dtype)


if __name__ == "__main__":
    B, H, S, D = 2, 2, 256, 64
    key = jax.random.PRNGKey(0)
    kq, kk, kv_ = jax.random.split(key, 3)
    q = jax.random.normal(kq, (B, H, S, D), dtype=jnp.float32)
    k = jax.random.normal(kk, (B, H, S, D), dtype=jnp.float32)
    v = jax.random.normal(kv_, (B, H, S, D), dtype=jnp.float32)

    ref = _reference_attention(q, k, v)

    # 1) Default (large) tiles: tq=256, tk clamps to 256 -> single kv step.
    out = jax.block_until_ready(mmdit_attention(q, k, v))
    assert out.shape == (B, H, S, D)
    assert jnp.allclose(out, ref, atol=5e-3, rtol=5e-3), "mismatch (default tiles)"

    # 2) Smaller tiles -> exercises the multi-step online-softmax recurrence.
    out_small = jax.block_until_ready(mmdit_attention(q, k, v, tq=128, tk=64))
    assert jnp.allclose(out_small, ref, atol=5e-3, rtol=5e-3), "mismatch (small tiles)"

    # 3) bf16 fast path: operands go to the MXU in bf16, accumulation in f32.
    qb, kb, vb = (x.astype(jnp.bfloat16) for x in (q, k, v))
    out_bf16 = jax.block_until_ready(mmdit_attention(qb, kb, vb))
    ref_bf16 = _reference_attention(
        qb.astype(jnp.float32), kb.astype(jnp.float32), vb.astype(jnp.float32)
    )
    assert jnp.allclose(
        out_bf16.astype(jnp.float32), ref_bf16, atol=5e-2, rtol=5e-2
    ), "mismatch (bf16)"

    print("KERNEL_OK")
</pallas_src>

<mosaic_0001>
module attributes {stable_mosaic.version = 11 : i64} {
  func.func @_flash_attn_kernel(%arg0: i32, %arg1: i32, %arg2: i32, %arg3: memref<1x256x64xf32, #tpu.memory_space<vmem>>, %arg4: memref<1x256x64xf32, #tpu.memory_space<vmem>>, %arg5: memref<1x256x64xf32, #tpu.memory_space<vmem>>, %arg6: memref<1x256x64xf32, #tpu.memory_space<vmem>>, %arg7: memref<256x64xf32, #tpu.memory_space<vmem>>, %arg8: memref<256x1xf32, #tpu.memory_space<vmem>>, %arg9: memref<256x1xf32, #tpu.memory_space<vmem>>, %arg10: memref<256x64xf32, #tpu.memory_space<vmem>>) attributes {dimension_semantics = [#tpu.dimension_semantics<parallel>, #tpu.dimension_semantics<parallel>, #tpu.dimension_semantics<arbitrary>], iteration_bounds = array<i64: 4, 1, 1>, scalar_prefetch = 0 : i64, scratch_operands = 4 : i64, tpu.core_type = #tpu.core_type<tc>, window_params = [{transform_indices = @transform_0, window_bounds = array<i64: 1, 256, 64>}, {transform_indices = @transform_1, window_bounds = array<i64: 1, 256, 64>}, {transform_indices = @transform_2, window_bounds = array<i64: 1, 256, 64>}, {transform_indices = @transform_3, window_bounds = array<i64: 1, 256, 64>}]} {
    %c0_i32 = arith.constant 0 : i32
    %0 = arith.cmpi eq, %arg2, %c0_i32 : i32
    %1 = arith.extui %0 : i1 to i32
    %c0_i32_0 = arith.constant 0 : i32
    %2 = arith.cmpi ne, %1, %c0_i32_0 : i32
    scf.if %2 {
      %c0_25 = arith.constant 0 : index
      %c0_26 = arith.constant 0 : index
      %c0_27 = arith.constant 0 : index
      %34 = vector.load %arg3[%c0_25, %c0_26, %c0_27] : memref<1x256x64xf32, #tpu.memory_space<vmem>>, vector<1x256x64xf32>
      %35 = vector.shape_cast %34 : vector<1x256x64xf32> to vector<256x64xf32>
      %cst_28 = arith.constant 1.250000e-01 : f32
      %36 = vector.broadcast %cst_28 : f32 to vector<256x64xf32>
      %37 = arith.mulf %35, %36 : vector<256x64xf32>
      %c0_29 = arith.constant 0 : index
      %c0_30 = arith.constant 0 : index
      %38 = vector.load %arg7[%c0_29, %c0_30] : memref<256x64xf32, #tpu.memory_space<vmem>>, vector<256x64xf32>
      tpu.vector_store %arg7[%c0_29, %c0_30], %37 {strides = array<i32>} : memref<256x64xf32, #tpu.memory_space<vmem>>, vector<256x64xf32>,
      %cst_31 = arith.constant 0xFF800000 : f32
      %39 = vector.broadcast %cst_31 : f32 to vector<256x1xf32>
      %c0_32 = arith.constant 0 : index
      %c0_33 = arith.constant 0 : index
      %40 = vector.load %arg8[%c0_32, %c0_33] : memref<256x1xf32, #tpu.memory_space<vmem>>, vector<256x1xf32>
      tpu.vector_store %arg8[%c0_32, %c0_33], %39 {strides = array<i32>} : memref<256x1xf32, #tpu.memory_space<vmem>>, vector<256x1xf32>,
      %cst_34 = arith.constant 0.000000e+00 : f32
      %41 = vector.broadcast %cst_34 : f32 to vector<256x1xf32>
      %c0_35 = arith.constant 0 : index
      %c0_36 = arith.constant 0 : index
      %42 = vector.load %arg9[%c0_35, %c0_36] : memref<256x1xf32, #tpu.memory_space<vmem>>, vector<256x1xf32>
      tpu.vector_store %arg9[%c0_35, %c0_36], %41 {strides = array<i32>} : memref<256x1xf32, #tpu.memory_space<vmem>>, vector<256x1xf32>,
      %cst_37 = arith.constant 0.000000e+00 : f32
      %43 = vector.broadcast %cst_37 : f32 to vector<256x64xf32>
      %c0_38 = arith.constant 0 : index
      %c0_39 = arith.constant 0 : index
      %44 = vector.load %arg10[%c0_38, %c0_39] : memref<256x64xf32, #tpu.memory_space<vmem>>, vector<256x64xf32>
      tpu.vector_store %arg10[%c0_38, %c0_39], %43 {strides = array<i32>} : memref<256x64xf32, #tpu.memory_space<vmem>>, vector<256x64xf32>,
    } else {
    }
    %c0 = arith.constant 0 : index
    %c0_1 = arith.constant 0 : index
    %3 = vector.load %arg7[%c0, %c0_1] : memref<256x64xf32, #tpu.memory_space<vmem>>, vector<256x64xf32>
    %c0_2 = arith.constant 0 : index
    %c0_3 = arith.constant 0 : index
    %c0_4 = arith.constant 0 : index
    %4 = vector.load %arg4[%c0_2, %c0_3, %c0_4] : memref<1x256x64xf32, #tpu.memory_space<vmem>>, vector<1x256x64xf32>
    %5 = vector.shape_cast %4 : vector<1x256x64xf32> to vector<256x64xf32>
    %c0_5 = arith.constant 0 : index
    %c0_6 = arith.constant 0 : index
    %c0_7 = arith.constant 0 : index
    %6 = vector.load %arg5[%c0_5, %c0_6, %c0_7] : memref<1x256x64xf32, #tpu.memory_space<vmem>>, vector<1x256x64xf32>
    %7 = vector.shape_cast %6 : vector<1x256x64xf32> to vector<256x64xf32>
    %cst = arith.constant dense<0.000000e+00> : vector<256x256xf32>
    %8 = tpu.matmul %3, %5, %cst {dimension_numbers = #tpu.dot_dimension_numbers<[1], [1], [0], [0], [0, 0, 1, 0], [], []>} : vector<256x64xf32>, vector<256x64xf32>, vector<256x256xf32> -> vector<256x256xf32>
    %c0_8 = arith.constant 0 : index
    %c0_9 = arith.constant 0 : index
    %9 = vector.load %arg8[%c0_8, %c0_9] : memref<256x1xf32, #tpu.memory_space<vmem>>, vector<256x1xf32>
    %cst_10 = arith.constant dense<0xFF800000> : vector<256xf32>
    %10 = vector.multi_reduction <maximumf>, %8, %cst_10 [1] : vector<256x256xf32> to vector<256xf32>
    %11 = vector.shape_cast %10 : vector<256xf32> to vector<256x1xf32>
    %12 = arith.maximumf %9, %11 : vector<256x1xf32>
    %13 = arith.subf %9, %12 : vector<256x1xf32>
    %14 = math.exp %13 : vector<256x1xf32>
    %15 = vector.broadcast %12 : vector<256x1xf32> to vector<256x256xf32>
    %16 = arith.subf %8, %15 : vector<256x256xf32>
    %17 = math.exp %16 : vector<256x256xf32>
    %c0_11 = arith.constant 0 : index
    %c0_12 = arith.constant 0 : index
    %18 = vector.load %arg9[%c0_11, %c0_12] : memref<256x1xf32, #tpu.memory_space<vmem>>, vector<256x1xf32>
    %19 = arith.mulf %14, %18 : vector<256x1xf32>
    %cst_13 = arith.constant dense<0.000000e+00> : vector<256xf32>
    %20 = vector.multi_reduction <add>, %17, %cst_13 [1] : vector<256x256xf32> to vector<256xf32>
    %21 = vector.shape_cast %20 : vector<256xf32> to vector<256x1xf32>
    %22 = arith.addf %19, %21 : vector<256x1xf32>
    %c0_14 = arith.constant 0 : index
    %c0_15 = arith.constant 0 : index
    %23 = vector.load %arg9[%c0_14, %c0_15] : memref<256x1xf32, #tpu.memory_space<vmem>>, vector<256x1xf32>
    tpu.vector_store %arg9[%c0_14, %c0_15], %22 {strides = array<i32>} : memref<256x1xf32, #tpu.memory_space<vmem>>, vector<256x1xf32>,
    %c0_16 = arith.constant 0 : index
    %c0_17 = arith.constant 0 : index
    %24 = vector.load %arg10[%c0_16, %c0_17] : memref<256x64xf32, #tpu.memory_space<vmem>>, vector<256x64xf32>
    %25 = vector.broadcast %14 : vector<256x1xf32> to vector<256x64xf32>
    %26 = arith.mulf %25, %24 : vector<256x64xf32>
    %cst_18 = arith.constant dense<0.000000e+00> : vector<256x64xf32>
    %27 = tpu.matmul %17, %7, %cst_18 {dimension_numbers = #tpu.dot_dimension_numbers<[1], [0], [0], [1], [0, 0, 1, 1], [], []>} : vector<256x256xf32>, vector<256x64xf32>, vector<256x64xf32> -> vector<256x64xf32>
    %28 = arith.addf %26, %27 : vector<256x64xf32>
    %c0_19 = arith.constant 0 : index
    %c0_20 = arith.constant 0 : index
    %29 = vector.load %arg10[%c0_19, %c0_20] : memref<256x64xf32, #tpu.memory_space<vmem>>, vector<256x64xf32>
    tpu.vector_store %arg10[%c0_19, %c0_20], %28 {strides = array<i32>} : memref<256x64xf32, #tpu.memory_space<vmem>>, vector<256x64xf32>,
    %c0_21 = arith.constant 0 : index
    %c0_22 = arith.constant 0 : index
    %30 = vector.load %arg8[%c0_21, %c0_22] : memref<256x1xf32, #tpu.memory_space<vmem>>, vector<256x1xf32>
    tpu.vector_store %arg8[%c0_21, %c0_22], %12 {strides = array<i32>} : memref<256x1xf32, #tpu.memory_space<vmem>>, vector<256x1xf32>,
    %c0_i32_23 = arith.constant 0 : i32
    %31 = arith.cmpi eq, %arg2, %c0_i32_23 : i32
    %32 = arith.extui %31 : i1 to i32
    %c0_i32_24 = arith.constant 0 : i32
    %33 = arith.cmpi ne, %32, %c0_i32_24 : i32
    scf.if %33 {
      %c0_25 = arith.constant 0 : index
      %c0_26 = arith.constant 0 : index
      %34 = vector.load %arg9[%c0_25, %c0_26] : memref<256x1xf32, #tpu.memory_space<vmem>>, vector<256x1xf32>
      %35 = tpu.reciprocal %34 {approx = true} : vector<256x1xf32> -> vector<256x1xf32>
      %c0_27 = arith.constant 0 : index
      %c0_28 = arith.constant 0 : index
      %36 = vector.load %arg10[%c0_27, %c0_28] : memref<256x64xf32, #tpu.memory_space<vmem>>, vector<256x64xf32>
      %37 = vector.broadcast %35 : vector<256x1xf32> to vector<256x64xf32>
      %38 = arith.mulf %36, %37 : vector<256x64xf32>
      %c0_29 = arith.constant 0 : index
      %c0_30 = arith.constant 0 : index
      %c0_31 = arith.constant 0 : index
      %39 = vector.load %arg6[%c0_29, %c0_30, %c0_31] : memref<1x256x64xf32, #tpu.memory_space<vmem>>, vector<1x256x64xf32>
      %40 = vector.shape_cast %39 : vector<1x256x64xf32> to vector<256x64xf32>
      %41 = vector.shape_cast %38 : vector<256x64xf32> to vector<1x256x64xf32>
      tpu.vector_store %arg6[%c0_29, %c0_30, %c0_31], %41 {strides = array<i32>} : memref<1x256x64xf32, #tpu.memory_space<vmem>>, vector<1x256x64xf32>,
    } else {
    }
    return
  }
  func.func @transform_0(%arg0: i32, %arg1: i32, %arg2: i32) -> (i32, i32, i32) {
    %c0_i32 = arith.constant 0 : i32
    %c0_i32_0 = arith.constant 0 : i32
    return %arg0, %arg1, %c0_i32 : i32, i32, i32
  }
  func.func @transform_1(%arg0: i32, %arg1: i32, %arg2: i32) -> (i32, i32, i32) {
    %c0_i32 = arith.constant 0 : i32
    %c0_i32_0 = arith.constant 0 : i32
    return %arg0, %arg2, %c0_i32 : i32, i32, i32
  }
  func.func @transform_2(%arg0: i32, %arg1: i32, %arg2: i32) -> (i32, i32, i32) {
    %c0_i32 = arith.constant 0 : i32
    %c0_i32_0 = arith.constant 0 : i32
    return %arg0, %arg2, %c0_i32 : i32, i32, i32
  }
  func.func @transform_3(%arg0: i32, %arg1: i32, %arg2: i32) -> (i32, i32, i32) {
    %c0_i32 = arith.constant 0 : i32
    %c0_i32_0 = arith.constant 0 : i32
    return %arg0, %arg1, %c0_i32 : i32, i32, i32
  }
}

</mosaic_0001>

<llo_original>
// kernel: tpu_custom_call.1
$region0: #{tpu_custom_call.1}
  #allocation0 [shape = 'u32[]', space=smem, size = 0x4, offset = 0x4, fixed_abs, tag = 'smem constant byte address 0x4 - core index']
  #allocation1 [shape = 'u32[144,128]{1,0:T(1,128)}', space=vmem, size = 0x12000, scoped, tag = 'internal scratch']
  #allocation2 [shape = 'f32[256,64]{1,0:T(8,128)}', space=vmem, size = 0x20000, scoped, tag = 'scratch operand']
  #allocation3 [shape = 'f32[256,1]{1,0:T(8,128)}', space=vmem, size = 0x20000, scoped, tag = 'scratch operand']
  #allocation4 [shape = 'f32[256,1]{1,0:T(8,128)}', space=vmem, size = 0x20000, scoped, tag = 'scratch operand']
  #allocation5 [shape = 'f32[256,64]{1,0:T(8,128)}', space=vmem, size = 0x20000, scoped, tag = 'scratch operand']
  %s0 = inlined_call_operand.vmem [shape: f32[4,256,64], index: 0, kind: input, shape index: {}]
  %s1 = inlined_call_operand.vmem [shape: f32[4,256,64], index: 1, kind: input, shape index: {}]
  %s2 = inlined_call_operand.vmem [shape: f32[4,256,64], index: 2, kind: input, shape index: {}]
  %s3 = inlined_call_operand.vmem [shape: f32[4,256,64], index: 3, kind: output, shape index: {}]
  %s4 = sld [smem:[#allocation0]]
  $region53: #{tpu_custom_call.1} parent=0
    _
  %s6 = ssub.s32 1, %s4
  %s7 = scalar_select 0, %s6, %s4
  loop: start=0, step=1, limit=6
  $region2: #{tpu_custom_call.1} parent=0 // loop_pre_header
    _
  $region3: #{tpu_custom_call.1} parent=0 // loop_header
    %s9 = sphi 0, %s13
    %p10 = scmp.ge.s32.totalorder %s9, 6
    %s16 = sphi 0, %s35
    %s17 = sphi 0, %s31
    %s18 = sphi 0, %s27
    %s19 = sphi 0, %s16
    %s20 = sphi 0, %s17
    %s21 = sphi 0, %s18
    %s22 = sphi 0, %s19
    %s23 = sphi 0, %s20
    %s24 = sphi 0, %s21
    %s40 = sphi 0, %s42
    %s43 = sphi 0, %s40
    %s44 = sphi 0, %s43
    %s60 = sphi 0, %s44
    %s68 = sphi 0, %s70
    %s71 = sphi 0, %s68
    %s72 = sphi 0, %s71
    %s88 = sphi 0, %s72
    %s96 = sphi 0, %s98
    %s99 = sphi 0, %s96
    %s100 = sphi 0, %s99
    %s116 = sphi 0, %s100
    %s124 = sphi 0, %s126
    %s127 = sphi 0, %s124
    %s128 = sphi 0, %s127
    %s144 = sphi 0, %s128
  $region4: #{tpu_custom_call.1} parent=0 // loop_header_branch
    %12 = sbr.rel (%p10) target = $region8
  $region5: #{tpu_custom_call.1} parent=0 // loop_body
    %s14 = ssub.s32 %s9, 1
    %s15 = ssub.s32 %s9, 2
    %s25 = sadd.s32 1, %s18
    %p26 = scmp.ge.s32.totalorder %s25, 1
    %s27 = scalar_select %p26, 0, %s25
    %s28 = sadd.s32 1, %s17
    %s29 = scalar_select %p26, %s28, %s17
    %p30 = scmp.ge.s32.totalorder %s29, 1
    %s31 = scalar_select %p30, 0, %s29
    %s32 = sadd.s32 1, %s16
    %s33 = scalar_select %p30, %s32, %s16
    %p34 = scmp.ge.s32.totalorder %s33, 4
    %s35 = scalar_select %p34, 0, %s33
    %s36 = ssub.s32 %s16, %s35
    %s37 = ssub.s32 %s17, %s31
    %s38 = sor.u32 %s36, %s37
    %p39 = scmp.eq.s32.totalorder %s38, 0
    %s41 = sadd.s32 %s40, 1
    %s42 = scalar_select %p39, %s40, %s41
    %p45 = pneg %p39
    %p46 = scmp.eq.s32.totalorder %s9, 3
    %p47 = por %p45, %p46
    %p48 = scmp.ne.s32.totalorder %s40, %s43
    %p49 = scmp.eq.s32.totalorder %s9, 0
    %p50 = por %p48, %p49
    %p51 = scmp.ne.s32.totalorder %s40, %s43
    %p52 = scmp.eq.s32.totalorder %s14, 3
    %p53 = por %p51, %p52
    %p54 = scmp.ne.s32.totalorder %s43, %s44
    %p55 = scmp.eq.s32.totalorder %s14, 0
    %p56 = por %p54, %p55
    %p57 = scmp.ne.s32.totalorder %s43, %s44
    %p58 = scmp.eq.s32.totalorder %s15, 3
    %p59 = por %p57, %p58
    %p61 = scmp.ne.s32.totalorder %s44, %s60
    %p62 = scmp.eq.s32.totalorder %s15, 0
    %p63 = por %p61, %p62
    %s64 = ssub.s32 %s16, %s35
    %s65 = ssub.s32 %s18, %s27
    %s66 = sor.u32 %s64, %s65
    %p67 = scmp.eq.s32.totalorder %s66, 0
    %s69 = sadd.s32 %s68, 1
    %s70 = scalar_select %p67, %s68, %s69
    %p73 = pneg %p67
    %p74 = scmp.eq.s32.totalorder %s9, 3
    %p75 = por %p73, %p74
    %p76 = scmp.ne.s32.totalorder %s68, %s71
    %p77 = scmp.eq.s32.totalorder %s9, 0
    %p78 = por %p76, %p77
    %p79 = scmp.ne.s32.totalorder %s68, %s71
    %p80 = scmp.eq.s32.totalorder %s14, 3
    %p81 = por %p79, %p80
    %p82 = scmp.ne.s32.totalorder %s71, %s72
    %p83 = scmp.eq.s32.totalorder %s14, 0
    %p84 = por %p82, %p83
    %p85 = scmp.ne.s32.totalorder %s71, %s72
    %p86 = scmp.eq.s32.totalorder %s15, 3
    %p87 = por %p85, %p86
    %p89 = scmp.ne.s32.totalorder %s72, %s88
    %p90 = scmp.eq.s32.totalorder %s15, 0
    %p91 = por %p89, %p90
    %s92 = ssub.s32 %s16, %s35
    %s93 = ssub.s32 %s18, %s27
    %s94 = sor.u32 %s92, %s93
    %p95 = scmp.eq.s32.totalorder %s94, 0
    %s97 = sadd.s32 %s96, 1
    %s98 = scalar_select %p95, %s96, %s97
    %p101 = pneg %p95
    %p102 = scmp.eq.s32.totalorder %s9, 3
    %p103 = por %p101, %p102
    %p104 = scmp.ne.s32.totalorder %s96, %s99
    %p105 = scmp.eq.s32.totalorder %s9, 0
    %p106 = por %p104, %p105
    %p107 = scmp.ne.s32.totalorder %s96, %s99
    %p108 = scmp.eq.s32.totalorder %s14, 3
    %p109 = por %p107, %p108
    %p110 = scmp.ne.s32.totalorder %s99, %s100
    %p111 = scmp.eq.s32.totalorder %s14, 0
    %p112 = por %p110, %p111
    %p113 = scmp.ne.s32.totalorder %s99, %s100
    %p114 = scmp.eq.s32.totalorder %s15, 3
    %p115 = por %p113, %p114
    %p117 = scmp.ne.s32.totalorder %s100, %s116
    %p118 = scmp.eq.s32.totalorder %s15, 0
    %p119 = por %p117, %p118
    %s120 = ssub.s32 %s16, %s35
    %s121 = ssub.s32 %s17, %s31
    %s122 = sor.u32 %s120, %s121
    %p123 = scmp.eq.s32.totalorder %s122, 0
    %s125 = sadd.s32 %s124, 1
    %s126 = scalar_select %p123, %s124, %s125
    %p129 = pneg %p123
    %p130 = scmp.eq.s32.totalorder %s9, 3
    %p131 = por %p129, %p130
    %p132 = scmp.ne.s32.totalorder %s124, %s127
    %p133 = scmp.eq.s32.totalorder %s9, 0
    %p134 = por %p132, %p133
    %p135 = scmp.ne.s32.totalorder %s124, %s127
    %p136 = scmp.eq.s32.totalorder %s14, 3
    %p137 = por %p135, %p136
    %p138 = scmp.ne.s32.totalorder %s127, %s128
    %p139 = scmp.eq.s32.totalorder %s14, 0
    %p140 = por %p138, %p139
    %p141 = scmp.ne.s32.totalorder %s127, %s128
    %p142 = scmp.eq.s32.totalorder %s15, 3
    %p143 = por %p141, %p142
    %p145 = scmp.ne.s32.totalorder %s128, %s144
    %p146 = scmp.eq.s32.totalorder %s15, 0
    %p147 = por %p145, %p146
    %p148 = scmp.le.s32.totalorder 1, %s9
    %p149 = scmp.lt.s32.totalorder %s9, 5
    %p150 = pnand %p148, %p149
    %p151 = pneg %p150
    // Predicated region
    $region9: #{tpu_custom_call.1} parent=5 // pred_check
      _
    $region10: #{tpu_custom_call.1} parent=5 // pred_check_branch
      %153 = sbr.rel (%p150) target = $region12
    $region11: #{tpu_custom_call.1} parent=5 // pred_region
      %s154 = ssub.s32 %s9, 1
    $region12: #{tpu_custom_call.1} parent=5 // pred_fallthru
      _
    %p155 = scmp.lt.s32.totalorder %s9, 4
    // Predicated region
    $region13: #{tpu_custom_call.1} parent=5 // pred_check
      %p156 = pneg %p155
    $region14: #{tpu_custom_call.1} parent=5 // pred_check_branch
      %158 = sbr.rel (%p156) target = $region16
    $region15: #{tpu_custom_call.1} parent=5 // pred_region
      // Predicated region
      $region17: #{tpu_custom_call.1} parent=15 // pred_check
        %p159 = pneg %p50
      $region18: #{tpu_custom_call.1} parent=15 // pred_check_branch
        %161 = sbr.rel (%p159) target = $region20
      $region19: #{tpu_custom_call.1} parent=15 // pred_region
        %s162 = smul.u32 32, %s17
        %p163 = scmp.lt.s32.totalorder %s16, 3
        %s164 = scalar_select %p163, %s16, 3
        %p165 = scmp.lt.s32.totalorder %s162, 31
        %s166 = scalar_select %p165, %s162, 31
        %s167 = smul.addr %s164, 32
        %s168 = sadd.s32 %s166, %s167
        %s169 = smul.addr %s168, 8
        %s170 = scalar_lea.vmem %s0, %s169
        %s171 = smul.u32 32, %s17
      $region20: #{tpu_custom_call.1} parent=15 // pred_fallthru
        _
      // Predicated region
      $region21: #{tpu_custom_call.1} parent=15 // pred_check
        %p172 = pneg %p78
      $region22: #{tpu_custom_call.1} parent=15 // pred_check_branch
        %174 = sbr.rel (%p172) target = $region24
      $region23: #{tpu_custom_call.1} parent=15 // pred_region
        %s175 = smul.u32 32, %s18
        %p176 = scmp.lt.s32.totalorder %s16, 3
        %s177 = scalar_select %p176, %s16, 3
        %p178 = scmp.lt.s32.totalorder %s175, 31
        %s179 = scalar_select %p178, %s175, 31
        %s180 = smul.addr %s177, 32
        %s181 = sadd.s32 %s179, %s180
        %s182 = smul.addr %s181, 8
        %s183 = scalar_lea.vmem %s1, %s182
        %s184 = smul.u32 32, %s18
      $region24: #{tpu_custom_call.1} parent=15 // pred_fallthru
        _
      // Predicated region
      $region25: #{tpu_custom_call.1} parent=15 // pred_check
        %p185 = pneg %p106
      $region26: #{tpu_custom_call.1} parent=15 // pred_check_branch
        %187 = sbr.rel (%p185) target = $region28
      $region27: #{tpu_custom_call.1} parent=15 // pred_region
        %s188 = smul.u32 32, %s18
        %p189 = scmp.lt.s32.totalorder %s16, 3
        %s190 = scalar_select %p189, %s16, 3
        %p191 = scmp.lt.s32.totalorder %s188, 31
        %s192 = scalar_select %p191, %s188, 31
        %s193 = smul.addr %s190, 32
        %s194 = sadd.s32 %s192, %s193
        %s195 = smul.addr %s194, 8
        %s196 = scalar_lea.vmem %s2, %s195
        %s197 = smul.u32 32, %s18
      $region28: #{tpu_custom_call.1} parent=15 // pred_fallthru
        _
    $region16: #{tpu_custom_call.1} parent=5 // pred_fallthru
      _
    %p198 = scmp.le.s32.totalorder 1, %s9
    %p199 = scmp.lt.s32.totalorder %s9, 5
    %p200 = pnand %p198, %p199
    %p201 = pneg %p200
    // Predicated region
    $region29: #{tpu_custom_call.1} parent=5 // pred_check
      _
    $region30: #{tpu_custom_call.1} parent=5 // pred_check_branch
      %203 = sbr.rel (%p200) target = $region32
    $region31: #{tpu_custom_call.1} parent=5 // pred_region
      %s204 = ssub.s32 %s9, 1
      %s205 = smul.u32 32, %s20
      %p206 = scmp.lt.s32.totalorder %s19, 3
      %s207 = scalar_select %p206, %s19, 3
      %p208 = scmp.lt.s32.totalorder %s205, 31
      %s209 = scalar_select %p208, %s205, 31
      %s210 = smul.addr %s207, 32
      %s211 = sadd.s32 %s209, %s210
      %s212 = smul.addr %s211, 8
      %s213 = scalar_lea.vmem %s0, %s212
      %p214 = pneg %p56
      %p215 = pneg %p53
      %s216 = smul.u32 32, %s21
      %p217 = scmp.lt.s32.totalorder %s19, 3
      %s218 = scalar_select %p217, %s19, 3
      %p219 = scmp.lt.s32.totalorder %s216, 31
      %s220 = scalar_select %p219, %s216, 31
      %s221 = smul.addr %s218, 32
      %s222 = sadd.s32 %s220, %s221
      %s223 = smul.addr %s222, 8
      %s224 = scalar_lea.vmem %s1, %s223
      %p225 = pneg %p84
      %p226 = pneg %p81
      %s227 = smul.u32 32, %s21
      %p228 = scmp.lt.s32.totalorder %s19, 3
      %s229 = scalar_select %p228, %s19, 3
      %p230 = scmp.lt.s32.totalorder %s227, 31
      %s231 = scalar_select %p230, %s227, 31
      %s232 = smul.addr %s229, 32
      %s233 = sadd.s32 %s231, %s232
      %s234 = smul.addr %s233, 8
      %s235 = scalar_lea.vmem %s2, %s234
      %p236 = pneg %p112
      %p237 = pneg %p109
      %p238 = pneg %p140
      %p239 = pneg %p137
      %s240 = smul.u32 32, %s20
      %p241 = scmp.lt.s32.totalorder %s19, 3
      %s242 = scalar_select %p241, %s19, 3
      %p243 = scmp.lt.s32.totalorder %s240, 31
      %s244 = scalar_select %p243, %s240, 31
      %s245 = smul.addr %s242, 32
      %s246 = sadd.s32 %s244, %s245
      %s247 = smul.addr %s246, 8
      %s248 = scalar_lea.vmem %s3, %s247
      %s249 = smul.u32 32, %s20
      %p250 = scmp.lt.s32.totalorder %s19, 3
      %s251 = scalar_select %p250, %s19, 3
      %p252 = scmp.lt.s32.totalorder %s249, 31
      %s253 = scalar_select %p252, %s249, 31
      %s254 = smul.addr %s251, 32
      %s255 = sadd.s32 %s253, %s254
      %s256 = smul.addr %s255, 8
      %s257 = scalar_lea.vmem %s0, %s256
      %s258 = smul.u32 32, %s20
      %s259 = smul.u32 32, %s21
      %p260 = scmp.lt.s32.totalorder %s19, 3
      %s261 = scalar_select %p260, %s19, 3
      %p262 = scmp.lt.s32.totalorder %s259, 31
      %s263 = scalar_select %p262, %s259, 31
      %s264 = smul.addr %s261, 32
      %s265 = sadd.s32 %s263, %s264
      %s266 = smul.addr %s265, 8
      %s267 = scalar_lea.vmem %s1, %s266
      %s268 = smul.u32 32, %s21
      %s269 = smul.u32 32, %s21
      %p270 = scmp.lt.s32.totalorder %s19, 3
      %s271 = scalar_select %p270, %s19, 3
      %p272 = scmp.lt.s32.totalorder %s269, 31
      %s273 = scalar_select %p272, %s269, 31
      %s274 = smul.addr %s271, 32
      %s275 = sadd.s32 %s273, %s274
      %s276 = smul.addr %s275, 8
      %s277 = scalar_lea.vmem %s2, %s276
      %s278 = smul.u32 32, %s21
      %s279 = smul.u32 32, %s20
      %p280 = scmp.lt.s32.totalorder %s19, 3
      %s281 = scalar_select %p280, %s19, 3
      %p282 = scmp.lt.s32.totalorder %s279, 31
      %s283 = scalar_select %p282, %s279, 31
      %s284 = smul.addr %s281, 32
      %s285 = sadd.s32 %s283, %s284
      %s286 = smul.addr %s285, 8
      %s287 = scalar_lea.vmem %s3, %s286
      %s288 = smul.u32 32, %s20
      %p289 = scmp.eq.s32.totalorder %s21, 0
      // Predicated region
      $region33: #{tpu_custom_call.1} parent=31 // pred_check
        %p290 = pneg %p289
      $region34: #{tpu_custom_call.1} parent=31 // pred_check_branch
        %292 = sbr.rel (%p290) target = $region36
      $region35: #{tpu_custom_call.1} parent=31 // pred_region
        %v293 = vld [vmem:[%s257] sm:$0xff]
        %v294 = vld [vmem:[%s257 + $0x8] sm:$0xff]
        %v295 = vld [vmem:[%s257 + $0x10] sm:$0xff]
        %v296 = vld [vmem:[%s257 + $0x18] sm:$0xff]
        %v297 = vld [vmem:[%s257 + $0x20] sm:$0xff]
        %v298 = vld [vmem:[%s257 + $0x28] sm:$0xff]
        %v299 = vld [vmem:[%s257 + $0x30] sm:$0xff]
        %v300 = vld [vmem:[%s257 + $0x38] sm:$0xff]
        %v301 = vld [vmem:[%s257 + $0x40] sm:$0xff]
        %v302 = vld [vmem:[%s257 + $0x48] sm:$0xff]
        %v303 = vld [vmem:[%s257 + $0x50] sm:$0xff]
        %v304 = vld [vmem:[%s257 + $0x58] sm:$0xff]
        %v305 = vld [vmem:[%s257 + $0x60] sm:$0xff]
        %v306 = vld [vmem:[%s257 + $0x68] sm:$0xff]
        %v307 = vld [vmem:[%s257 + $0x70] sm:$0xff]
        %v308 = vld [vmem:[%s257 + $0x78] sm:$0xff]
        %v309 = vld [vmem:[%s257 + $0x80] sm:$0xff]
        %v310 = vld [vmem:[%s257 + $0x88] sm:$0xff]
        %v311 = vld [vmem:[%s257 + $0x90] sm:$0xff]
        %v312 = vld [vmem:[%s257 + $0x98] sm:$0xff]
        %v313 = vld [vmem:[%s257 + $0xa0] sm:$0xff]
        %v314 = vld [vmem:[%s257 + $0xa8] sm:$0xff]
        %v315 = vld [vmem:[%s257 + $0xb0] sm:$0xff]
        %v316 = vld [vmem:[%s257 + $0xb8] sm:$0xff]
        %v317 = vld [vmem:[%s257 + $0xc0] sm:$0xff]
        %v318 = vld [vmem:[%s257 + $0xc8] sm:$0xff]
        %v319 = vld [vmem:[%s257 + $0xd0] sm:$0xff]
        %v320 = vld [vmem:[%s257 + $0xd8] sm:$0xff]
        %v321 = vld [vmem:[%s257 + $0xe0] sm:$0xff]
        %v322 = vld [vmem:[%s257 + $0xe8] sm:$0xff]
        %v323 = vld [vmem:[%s257 + $0xf0] sm:$0xff]
        %v324 = vld [vmem:[%s257 + $0xf8] sm:$0xff]
        %v325 = vmul.f32 %v293, 0.125
        %v326 = vmul.f32 %v294, 0.125
        %v327 = vmul.f32 %v295, 0.125
        %v328 = vmul.f32 %v296, 0.125
        %v329 = vmul.f32 %v297, 0.125
        %v330 = vmul.f32 %v298, 0.125
        %v331 = vmul.f32 %v299, 0.125
        %v332 = vmul.f32 %v300, 0.125
        %v333 = vmul.f32 %v301, 0.125
        %v334 = vmul.f32 %v302, 0.125
        %v335 = vmul.f32 %v303, 0.125
        %v336 = vmul.f32 %v304, 0.125
        %v337 = vmul.f32 %v305, 0.125
        %v338 = vmul.f32 %v306, 0.125
        %v339 = vmul.f32 %v307, 0.125
        %v340 = vmul.f32 %v308, 0.125
        %v341 = vmul.f32 %v309, 0.125
        %v342 = vmul.f32 %v310, 0.125
        %v343 = vmul.f32 %v311, 0.125
        %v344 = vmul.f32 %v312, 0.125
        %v345 = vmul.f32 %v313, 0.125
        %v346 = vmul.f32 %v314, 0.125
        %v347 = vmul.f32 %v315, 0.125
        %v348 = vmul.f32 %v316, 0.125
        %v349 = vmul.f32 %v317, 0.125
        %v350 = vmul.f32 %v318, 0.125
        %v351 = vmul.f32 %v319, 0.125
        %v352 = vmul.f32 %v320, 0.125
        %v353 = vmul.f32 %v321, 0.125
        %v354 = vmul.f32 %v322, 0.125
        %v355 = vmul.f32 %v323, 0.125
        %v356 = vmul.f32 %v324, 0.125
        %vm357 = vcmask 523264
        %358 = vst.msk [vmem:[#allocation2] sm:$0xff] %vm357, %v325
        %359 = vst.msk [vmem:[#allocation2 + $0x8] sm:$0xff] %vm357, %v326
        %360 = vst.msk [vmem:[#allocation2 + $0x10] sm:$0xff] %vm357, %v327
        %361 = vst.msk [vmem:[#allocation2 + $0x18] sm:$0xff] %vm357, %v328
        %362 = vst.msk [vmem:[#allocation2 + $0x20] sm:$0xff] %vm357, %v329
        %363 = vst.msk [vmem:[#allocation2 + $0x28] sm:$0xff] %vm357, %v330
        %364 = vst.msk [vmem:[#allocation2 + $0x30] sm:$0xff] %vm357, %v331
        %365 = vst.msk [vmem:[#allocation2 + $0x38] sm:$0xff] %vm357, %v332
        %366 = vst.msk [vmem:[#allocation2 + $0x40] sm:$0xff] %vm357, %v333
        %367 = vst.msk [vmem:[#allocation2 + $0x48] sm:$0xff] %vm357, %v334
        %368 = vst.msk [vmem:[#allocation2 + $0x50] sm:$0xff] %vm357, %v335
        %369 = vst.msk [vmem:[#allocation2 + $0x58] sm:$0xff] %vm357, %v336
        %370 = vst.msk [vmem:[#allocation2 + $0x60] sm:$0xff] %vm357, %v337
        %371 = vst.msk [vmem:[#allocation2 + $0x68] sm:$0xff] %vm357, %v338
        %372 = vst.msk [vmem:[#allocation2 + $0x70] sm:$0xff] %vm357, %v339
        %373 = vst.msk [vmem:[#allocation2 + $0x78] sm:$0xff] %vm357, %v340
        %374 = vst.msk [vmem:[#allocation2 + $0x80] sm:$0xff] %vm357, %v341
        %375 = vst.msk [vmem:[#allocation2 + $0x88] sm:$0xff] %vm357, %v342
        %376 = vst.msk [vmem:[#allocation2 + $0x90] sm:$0xff] %vm357, %v343
        %377 = vst.msk [vmem:[#allocation2 + $0x98] sm:$0xff] %vm357, %v344
        %378 = vst.msk [vmem:[#allocation2 + $0xa0] sm:$0xff] %vm357, %v345
        %379 = vst.msk [vmem:[#allocation2 + $0xa8] sm:$0xff] %vm357, %v346
        %380 = vst.msk [vmem:[#allocation2 + $0xb0] sm:$0xff] %vm357, %v347
        %381 = vst.msk [vmem:[#allocation2 + $0xb8] sm:$0xff] %vm357, %v348
        %382 = vst.msk [vmem:[#allocation2 + $0xc0] sm:$0xff] %vm357, %v349
        %383 = vst.msk [vmem:[#allocation2 + $0xc8] sm:$0xff] %vm357, %v350
        %384 = vst.msk [vmem:[#allocation2 + $0xd0] sm:$0xff] %vm357, %v351
        %385 = vst.msk [vmem:[#allocation2 + $0xd8] sm:$0xff] %vm357, %v352
        %386 = vst.msk [vmem:[#allocation2 + $0xe0] sm:$0xff] %vm357, %v353
        %387 = vst.msk [vmem:[#allocation2 + $0xe8] sm:$0xff] %vm357, %v354
        %388 = vst.msk [vmem:[#allocation2 + $0xf0] sm:$0xff] %vm357, %v355
        %389 = vst.msk [vmem:[#allocation2 + $0xf8] sm:$0xff] %vm357, %v356
        %vm390 = vcmask 7168
        %391 = vst.msk [vmem:[#allocation3] sm:$0xff] %vm390, -inf
        %392 = vst.msk [vmem:[#allocation3 + $0x8] sm:$0xff] %vm390, -inf
        %393 = vst.msk [vmem:[#allocation3 + $0x10] sm:$0xff] %vm390, -inf
        %394 = vst.msk [vmem:[#allocation3 + $0x18] sm:$0xff] %vm390, -inf
        %395 = vst.msk [vmem:[#allocation3 + $0x20] sm:$0xff] %vm390, -inf
        %396 = vst.msk [vmem:[#allocation3 + $0x28] sm:$0xff] %vm390, -inf
        %397 = vst.msk [vmem:[#allocation3 + $0x30] sm:$0xff] %vm390, -inf
        %398 = vst.msk [vmem:[#allocation3 + $0x38] sm:$0xff] %vm390, -inf
        %399 = vst.msk [vmem:[#allocation3 + $0x40] sm:$0xff] %vm390, -inf
        %400 = vst.msk [vmem:[#allocation3 + $0x48] sm:$0xff] %vm390, -inf
        %401 = vst.msk [vmem:[#allocation3 + $0x50] sm:$0xff] %vm390, -inf
        %402 = vst.msk [vmem:[#allocation3 + $0x58] sm:$0xff] %vm390, -inf
        %403 = vst.msk [vmem:[#allocation3 + $0x60] sm:$0xff] %vm390, -inf
        %404 = vst.msk [vmem:[#allocation3 + $0x68] sm:$0xff] %vm390, -inf
        %405 = vst.msk [vmem:[#allocation3 + $0x70] sm:$0xff] %vm390, -inf
        %406 = vst.msk [vmem:[#allocation3 + $0x78] sm:$0xff] %vm390, -inf
        %407 = vst.msk [vmem:[#allocation3 + $0x80] sm:$0xff] %vm390, -inf
        %408 = vst.msk [vmem:[#allocation3 + $0x88] sm:$0xff] %vm390, -inf
        %409 = vst.msk [vmem:[#allocation3 + $0x90] sm:$0xff] %vm390, -inf
        %410 = vst.msk [vmem:[#allocation3 + $0x98] sm:$0xff] %vm390, -inf
        %411 = vst.msk [vmem:[#allocation3 + $0xa0] sm:$0xff] %vm390, -inf
        %412 = vst.msk [vmem:[#allocation3 + $0xa8] sm:$0xff] %vm390, -inf
        %413 = vst.msk [vmem:[#allocation3 + $0xb0] sm:$0xff] %vm390, -inf
        %414 = vst.msk [vmem:[#allocation3 + $0xb8] sm:$0xff] %vm390, -inf
        %415 = vst.msk [vmem:[#allocation3 + $0xc0] sm:$0xff] %vm390, -inf
        %416 = vst.msk [vmem:[#allocation3 + $0xc8] sm:$0xff] %vm390, -inf
        %417 = vst.msk [vmem:[#allocation3 + $0xd0] sm:$0xff] %vm390, -inf
        %418 = vst.msk [vmem:[#allocation3 + $0xd8] sm:$0xff] %vm390, -inf
        %419 = vst.msk [vmem:[#allocation3 + $0xe0] sm:$0xff] %vm390, -inf
        %420 = vst.msk [vmem:[#allocation3 + $0xe8] sm:$0xff] %vm390, -inf
        %421 = vst.msk [vmem:[#allocation3 + $0xf0] sm:$0xff] %vm390, -inf
        %422 = vst.msk [vmem:[#allocation3 + $0xf8] sm:$0xff] %vm390, -inf
        %423 = vst.msk [vmem:[#allocation4] sm:$0xff] %vm390, 0.0
        %424 = vst.msk [vmem:[#allocation4 + $0x8] sm:$0xff] %vm390, 0.0
        %425 = vst.msk [vmem:[#allocation4 + $0x10] sm:$0xff] %vm390, 0.0
        %426 = vst.msk [vmem:[#allocation4 + $0x18] sm:$0xff] %vm390, 0.0
        %427 = vst.msk [vmem:[#allocation4 + $0x20] sm:$0xff] %vm390, 0.0
        %428 = vst.msk [vmem:[#allocation4 + $0x28] sm:$0xff] %vm390, 0.0
        %429 = vst.msk [vmem:[#allocation4 + $0x30] sm:$0xff] %vm390, 0.0
        %430 = vst.msk [vmem:[#allocation4 + $0x38] sm:$0xff] %vm390, 0.0
        %431 = vst.msk [vmem:[#allocation4 + $0x40] sm:$0xff] %vm390, 0.0
        %432 = vst.msk [vmem:[#allocation4 + $0x48] sm:$0xff] %vm390, 0.0
        %433 = vst.msk [vmem:[#allocation4 + $0x50] sm:$0xff] %vm390, 0.0
        %434 = vst.msk [vmem:[#allocation4 + $0x58] sm:$0xff] %vm390, 0.0
        %435 = vst.msk [vmem:[#allocation4 + $0x60] sm:$0xff] %vm390, 0.0
        %436 = vst.msk [vmem:[#allocation4 + $0x68] sm:$0xff] %vm390, 0.0
        %437 = vst.msk [vmem:[#allocation4 + $0x70] sm:$0xff] %vm390, 0.0
        %438 = vst.msk [vmem:[#allocation4 + $0x78] sm:$0xff] %vm390, 0.0
        %439 = vst.msk [vmem:[#allocation4 + $0x80] sm:$0xff] %vm390, 0.0
        %440 = vst.msk [vmem:[#allocation4 + $0x88] sm:$0xff] %vm390, 0.0
        %441 = vst.msk [vmem:[#allocation4 + $0x90] sm:$0xff] %vm390, 0.0
        %442 = vst.msk [vmem:[#allocation4 + $0x98] sm:$0xff] %vm390, 0.0
        %443 = vst.msk [vmem:[#allocation4 + $0xa0] sm:$0xff] %vm390, 0.0
        %444 = vst.msk [vmem:[#allocation4 + $0xa8] sm:$0xff] %vm390, 0.0
        %445 = vst.msk [vmem:[#allocation4 + $0xb0] sm:$0xff] %vm390, 0.0
        %446 = vst.msk [vmem:[#allocation4 + $0xb8] sm:$0xff] %vm390, 0.0
        %447 = vst.msk [vmem:[#allocation4 + $0xc0] sm:$0xff] %vm390, 0.0
        %448 = vst.msk [vmem:[#allocation4 + $0xc8] sm:$0xff] %vm390, 0.0
        %449 = vst.msk [vmem:[#allocation4 + $0xd0] sm:$0xff] %vm390, 0.0
        %450 = vst.msk [vmem:[#allocation4 + $0xd8] sm:$0xff] %vm390, 0.0
        %451 = vst.msk [vmem:[#allocation4 + $0xe0] sm:$0xff] %vm390, 0.0
        %452 = vst.msk [vmem:[#allocation4 + $0xe8] sm:$0xff] %vm390, 0.0
        %453 = vst.msk [vmem:[#allocation4 + $0xf0] sm:$0xff] %vm390, 0.0
        %454 = vst.msk [vmem:[#allocation4 + $0xf8] sm:$0xff] %vm390, 0.0
        %455 = vst.msk [vmem:[#allocation5] sm:$0xff] %vm357, 0.0
        %456 = vst.msk [vmem:[#allocation5 + $0x8] sm:$0xff] %vm357, 0.0
        %457 = vst.msk [vmem:[#allocation5 + $0x10] sm:$0xff] %vm357, 0.0
        %458 = vst.msk [vmem:[#allocation5 + $0x18] sm:$0xff] %vm357, 0.0
        %459 = vst.msk [vmem:[#allocation5 + $0x20] sm:$0xff] %vm357, 0.0
        %460 = vst.msk [vmem:[#allocation5 + $0x28] sm:$0xff] %vm357, 0.0
        %461 = vst.msk [vmem:[#allocation5 + $0x30] sm:$0xff] %vm357, 0.0
        %462 = vst.msk [vmem:[#allocation5 + $0x38] sm:$0xff] %vm357, 0.0
        %463 = vst.msk [vmem:[#allocation5 + $0x40] sm:$0xff] %vm357, 0.0
        %464 = vst.msk [vmem:[#allocation5 + $0x48] sm:$0xff] %vm357, 0.0
        %465 = vst.msk [vmem:[#allocation5 + $0x50] sm:$0xff] %vm357, 0.0
        %466 = vst.msk [vmem:[#allocation5 + $0x58] sm:$0xff] %vm357, 0.0
        %467 = vst.msk [vmem:[#allocation5 + $0x60] sm:$0xff] %vm357, 0.0
        %468 = vst.msk [vmem:[#allocation5 + $0x68] sm:$0xff] %vm357, 0.0
        %469 = vst.msk [vmem:[#allocation5 + $0x70] sm:$0xff] %vm357, 0.0
        %470 = vst.msk [vmem:[#allocation5 + $0x78] sm:$0xff] %vm357, 0.0
        %471 = vst.msk [vmem:[#allocation5 + $0x80] sm:$0xff] %vm357, 0.0
        %472 = vst.msk [vmem:[#allocation5 + $0x88] sm:$0xff] %vm357, 0.0
        %473 = vst.msk [vmem:[#allocation5 + $0x90] sm:$0xff] %vm357, 0.0
        %474 = vst.msk [vmem:[#allocation5 + $0x98] sm:$0xff] %vm357, 0.0
        %475 = vst.msk [vmem:[#allocation5 + $0xa0] sm:$0xff] %vm357, 0.0
        %476 = vst.msk [vmem:[#allocation5 + $0xa8] sm:$0xff] %vm357, 0.0
        %477 = vst.msk [vmem:[#allocation5 + $0xb0] sm:$0xff] %vm357, 0.0
        %478 = vst.msk [vmem:[#allocation5 + $0xb8] sm:$0xff] %vm357, 0.0
        %479 = vst.msk [vmem:[#allocation5 + $0xc0] sm:$0xff] %vm357, 0.0
        %480 = vst.msk [vmem:[#allocation5 + $0xc8] sm:$0xff] %vm357, 0.0
        %481 = vst.msk [vmem:[#allocation5 + $0xd0] sm:$0xff] %vm357, 0.0
        %482 = vst.msk [vmem:[#allocation5 + $0xd8] sm:$0xff] %vm357, 0.0
        %483 = vst.msk [vmem:[#allocation5 + $0xe0] sm:$0xff] %vm357, 0.0
        %484 = vst.msk [vmem:[#allocation5 + $0xe8] sm:$0xff] %vm357, 0.0
        %485 = vst.msk [vmem:[#allocation5 + $0xf0] sm:$0xff] %vm357, 0.0
        %486 = vst.msk [vmem:[#allocation5 + $0xf8] sm:$0xff] %vm357, 0.0
      $region36: #{tpu_custom_call.1} parent=31 // pred_fallthru
        _
      %v487 = vld [vmem:[#allocation2] sm:$0xff]
      %v488 = vld [vmem:[#allocation2 + $0x8] sm:$0xff]
      %v489 = vld [vmem:[#allocation2 + $0x10] sm:$0xff]
      %v490 = vld [vmem:[#allocation2 + $0x18] sm:$0xff]
      %v491 = vld [vmem:[#allocation2 + $0x20] sm:$0xff]
      %v492 = vld [vmem:[#allocation2 + $0x28] sm:$0xff]
      %v493 = vld [vmem:[#allocation2 + $0x30] sm:$0xff]
      %v494 = vld [vmem:[#allocation2 + $0x38] sm:$0xff]
      %v495 = vld [vmem:[#allocation2 + $0x40] sm:$0xff]
      %v496 = vld [vmem:[#allocation2 + $0x48] sm:$0xff]
      %v497 = vld [vmem:[#allocation2 + $0x50] sm:$0xff]
      %v498 = vld [vmem:[#allocation2 + $0x58] sm:$0xff]
      %v499 = vld [vmem:[#allocation2 + $0x60] sm:$0xff]
      %v500 = vld [vmem:[#allocation2 + $0x68] sm:$0xff]
      %v501 = vld [vmem:[#allocation2 + $0x70] sm:$0xff]
      %v502 = vld [vmem:[#allocation2 + $0x78] sm:$0xff]
      %v503 = vld [vmem:[#allocation2 + $0x80] sm:$0xff]
      %v504 = vld [vmem:[#allocation2 + $0x88] sm:$0xff]
      %v505 = vld [vmem:[#allocation2 + $0x90] sm:$0xff]
      %v506 = vld [vmem:[#allocation2 + $0x98] sm:$0xff]
      %v507 = vld [vmem:[#allocation2 + $0xa0] sm:$0xff]
      %v508 = vld [vmem:[#allocation2 + $0xa8] sm:$0xff]
      %v509 = vld [vmem:[#allocation2 + $0xb0] sm:$0xff]
      %v510 = vld [vmem:[#allocation2 + $0xb8] sm:$0xff]
      %v511 = vld [vmem:[#allocation2 + $0xc0] sm:$0xff]
      %v512 = vld [vmem:[#allocation2 + $0xc8] sm:$0xff]
      %v513 = vld [vmem:[#allocation2 + $0xd0] sm:$0xff]
      %v514 = vld [vmem:[#allocation2 + $0xd8] sm:$0xff]
      %v515 = vld [vmem:[#allocation2 + $0xe0] sm:$0xff]
      %v516 = vld [vmem:[#allocation2 + $0xe8] sm:$0xff]
      %v517 = vld [vmem:[#allocation2 + $0xf0] sm:$0xff]
      %v518 = vld [vmem:[#allocation2 + $0xf8] sm:$0xff]
      %v519 = vld [vmem:[%s267] sm:$0xff]
      %v520 = vld [vmem:[%s267 + $0x8] sm:$0xff]
      %v521 = vld [vmem:[%s267 + $0x10] sm:$0xff]
      %v522 = vld [vmem:[%s267 + $0x18] sm:$0xff]
      %v523 = vld [vmem:[%s267 + $0x20] sm:$0xff]
      %v524 = vld [vmem:[%s267 + $0x28] sm:$0xff]
      %v525 = vld [vmem:[%s267 + $0x30] sm:$0xff]
      %v526 = vld [vmem:[%s267 + $0x38] sm:$0xff]
      %v527 = vld [vmem:[%s267 + $0x40] sm:$0xff]
      %v528 = vld [vmem:[%s267 + $0x48] sm:$0xff]
      %v529 = vld [vmem:[%s267 + $0x50] sm:$0xff]
      %v530 = vld [vmem:[%s267 + $0x58] sm:$0xff]
      %v531 = vld [vmem:[%s267 + $0x60] sm:$0xff]
      %v532 = vld [vmem:[%s267 + $0x68] sm:$0xff]
      %v533 = vld [vmem:[%s267 + $0x70] sm:$0xff]
      %v534 = vld [vmem:[%s267 + $0x78] sm:$0xff]
      %v535 = vld [vmem:[%s267 + $0x80] sm:$0xff]
      %v536 = vld [vmem:[%s267 + $0x88] sm:$0xff]
      %v537 = vld [vmem:[%s267 + $0x90] sm:$0xff]
      %v538 = vld [vmem:[%s267 + $0x98] sm:$0xff]
      %v539 = vld [vmem:[%s267 + $0xa0] sm:$0xff]
      %v540 = vld [vmem:[%s267 + $0xa8] sm:$0xff]
      %v541 = vld [vmem:[%s267 + $0xb0] sm:$0xff]
      %v542 = vld [vmem:[%s267 + $0xb8] sm:$0xff]
      %v543 = vld [vmem:[%s267 + $0xc0] sm:$0xff]
      %v544 = vld [vmem:[%s267 + $0xc8] sm:$0xff]
      %v545 = vld [vmem:[%s267 + $0xd0] sm:$0xff]
      %v546 = vld [vmem:[%s267 + $0xd8] sm:$0xff]
      %v547 = vld [vmem:[%s267 + $0xe0] sm:$0xff]
      %v548 = vld [vmem:[%s267 + $0xe8] sm:$0xff]
      %v549 = vld [vmem:[%s267 + $0xf0] sm:$0xff]
      %v550 = vld [vmem:[%s267 + $0xf8] sm:$0xff]
      %v551 = vld [vmem:[%s277] sm:$0xff]
      %v552 = vld [vmem:[%s277 + $0x8] sm:$0xff]
      %v553 = vld [vmem:[%s277 + $0x10] sm:$0xff]
      %v554 = vld [vmem:[%s277 + $0x18] sm:$0xff]
      %v555 = vld [vmem:[%s277 + $0x20] sm:$0xff]
      %v556 = vld [vmem:[%s277 + $0x28] sm:$0xff]
      %v557 = vld [vmem:[%s277 + $0x30] sm:$0xff]
      %v558 = vld [vmem:[%s277 + $0x38] sm:$0xff]
      %v559 = vld [vmem:[%s277 + $0x40] sm:$0xff]
      %v560 = vld [vmem:[%s277 + $0x48] sm:$0xff]
      %v561 = vld [vmem:[%s277 + $0x50] sm:$0xff]
      %v562 = vld [vmem:[%s277 + $0x58] sm:$0xff]
      %v563 = vld [vmem:[%s277 + $0x60] sm:$0xff]
      %v564 = vld [vmem:[%s277 + $0x68] sm:$0xff]
      %v565 = vld [vmem:[%s277 + $0x70] sm:$0xff]
      %v566 = vld [vmem:[%s277 + $0x78] sm:$0xff]
      %v567 = vld [vmem:[%s277 + $0x80] sm:$0xff]
      %v568 = vld [vmem:[%s277 + $0x88] sm:$0xff]
      %v569 = vld [vmem:[%s277 + $0x90] sm:$0xff]
      %v570 = vld [vmem:[%s277 + $0x98] sm:$0xff]
      %v571 = vld [vmem:[%s277 + $0xa0] sm:$0xff]
      %v572 = vld [vmem:[%s277 + $0xa8] sm:$0xff]
      %v573 = vld [vmem:[%s277 + $0xb0] sm:$0xff]
      %v574 = vld [vmem:[%s277 + $0xb8] sm:$0xff]
      %v575 = vld [vmem:[%s277 + $0xc0] sm:$0xff]
      %v576 = vld [vmem:[%s277 + $0xc8] sm:$0xff]
      %v577 = vld [vmem:[%s277 + $0xd0] sm:$0xff]
      %v578 = vld [vmem:[%s277 + $0xd8] sm:$0xff]
      %v579 = vld [vmem:[%s277 + $0xe0] sm:$0xff]
      %v580 = vld [vmem:[%s277 + $0xe8] sm:$0xff]
      %v581 = vld [vmem:[%s277 + $0xf0] sm:$0xff]
      %v582 = vld [vmem:[%s277 + $0xf8] sm:$0xff]
      %vm583 = vcmask 523264
      %v585 = vsel %vm583, %v487, 0
      %v588 = vsel %vm583, %v488, 0
      %v591 = vsel %vm583, %v489, 0
      %v594 = vsel %vm583, %v490, 0
      %v597 = vsel %vm583, %v491, 0
      %v600 = vsel %vm583, %v492, 0
      %v603 = vsel %vm583, %v493, 0
      %v606 = vsel %vm583, %v494, 0
      %v609 = vsel %vm583, %v495, 0
      %v612 = vsel %vm583, %v496, 0
      %v615 = vsel %vm583, %v497, 0
      %v618 = vsel %vm583, %v498, 0
      %v621 = vsel %vm583, %v499, 0
      %v624 = vsel %vm583, %v500, 0
      %v627 = vsel %vm583, %v501, 0
      %v630 = vsel %vm583, %v502, 0
      %v633 = vsel %vm583, %v503, 0
      %v636 = vsel %vm583, %v504, 0
      %v639 = vsel %vm583, %v505, 0
      %v642 = vsel %vm583, %v506, 0
      %v645 = vsel %vm583, %v507, 0
      %v648 = vsel %vm583, %v508, 0
      %v651 = vsel %vm583, %v509, 0
      %v654 = vsel %vm583, %v510, 0
      %v657 = vsel %vm583, %v511, 0
      %v660 = vsel %vm583, %v512, 0
      %v663 = vsel %vm583, %v513, 0
      %v666 = vsel %vm583, %v514, 0
      %v669 = vsel %vm583, %v515, 0
      %v672 = vsel %vm583, %v516, 0
      %v675 = vsel %vm583, %v517, 0
      %v678 = vsel %vm583, %v518, 0
      %v681 = vsel %vm583, %v519, 0
      %v684 = vsel %vm583, %v520, 0
      %v687 = vsel %vm583, %v521, 0
      %v690 = vsel %vm583, %v522, 0
      %v693 = vsel %vm583, %v523, 0
      %v696 = vsel %vm583, %v524, 0
      %v699 = vsel %vm583, %v525, 0
      %v702 = vsel %vm583, %v526, 0
      %v705 = vsel %vm583, %v527, 0
      %v708 = vsel %vm583, %v528, 0
      %v711 = vsel %vm583, %v529, 0
      %v714 = vsel %vm583, %v530, 0
      %v717 = vsel %vm583, %v531, 0
      %v720 = vsel %vm583, %v532, 0
      %v723 = vsel %vm583, %v533, 0
      %v726 = vsel %vm583, %v534, 0
      %v729 = vsel %vm583, %v535, 0
      %v732 = vsel %vm583, %v536, 0
      %v735 = vsel %vm583, %v537, 0
      %v738 = vsel %vm583, %v538, 0
      %v741 = vsel %vm583, %v539, 0
      %v744 = vsel %vm583, %v540, 0
      %v747 = vsel %vm583, %v541, 0
      %v750 = vsel %vm583, %v542, 0
      %v753 = vsel %vm583, %v543, 0
      %v756 = vsel %vm583, %v544, 0
      %v759 = vsel %vm583, %v545, 0
      %v762 = vsel %vm583, %v546, 0
      %v765 = vsel %vm583, %v547, 0
      %v768 = vsel %vm583, %v548, 0
      %v771 = vsel %vm583, %v549, 0
      %v774 = vsel %vm583, %v550, 0
      %776 = vmatprep.subr.mxu0 0.0
      %777 = vmatpush1.xpose.msra.mxu0 %v681
      %778 = vmatprep.subr.mxu0 0.0
      %779 = vmatpush1.xpose.msra.mxu0 %v684
      %780 = vmatprep.subr.mxu0 0.0
      %781 = vmatpush1.xpose.msra.mxu0 %v687
      %782 = vmatprep.subr.mxu0 0.0
      %783 = vmatpush1.xpose.msra.mxu0 %v690
      %784 = vmatprep.subr.mxu0 0.0
      %785 = vmatpush1.xpose.msra.mxu0 %v693
      %786 = vmatprep.subr.mxu0 0.0
      %787 = vmatpush1.xpose.msra.mxu0 %v696
      %788 = vmatprep.subr.mxu0 0.0
      %789 = vmatpush1.xpose.msra.mxu0 %v699
      %790 = vmatprep.subr.mxu0 0.0
      %791 = vmatpush1.xpose.msra.mxu0 %v702
      %792 = vmatprep.subr.mxu0 0.0
      %793 = vmatpush1.xpose.msra.mxu0 %v705
      %794 = vmatprep.subr.mxu0 0.0
      %795 = vmatpush1.xpose.msra.mxu0 %v708
      %796 = vmatprep.subr.mxu0 0.0
      %797 = vmatpush1.xpose.msra.mxu0 %v711
      %798 = vmatprep.subr.mxu0 0.0
      %799 = vmatpush1.xpose.msra.mxu0 %v714
      %800 = vmatprep.subr.mxu0 0.0
      %801 = vmatpush1.xpose.msra.mxu0 %v717
      %802 = vmatprep.subr.mxu0 0.0
      %803 = vmatpush1.xpose.msra.mxu0 %v720
      %804 = vmatprep.subr.mxu0 0.0
      %805 = vmatpush1.xpose.msra.mxu0 %v723
      %806 = vmatprep.subr.mxu0 0.0
      %807 = vmatpush1.xpose.msra.mxu0 %v726
      %808 = vmatprep.subr.mxu0 0.0
      %809 = vmatpush1.xpose.msra.mxu0 %v729
      %810 = vmatprep.subr.mxu0 0.0
      %811 = vmatpush1.xpose.msra.mxu0 %v732
      %812 = vmatprep.subr.mxu0 0.0
      %813 = vmatpush1.xpose.msra.mxu0 %v735
      %814 = vmatprep.subr.mxu0 0.0
      %815 = vmatpush1.xpose.msra.mxu0 %v738
      %816 = vmatprep.subr.mxu0 0.0
      %817 = vmatpush1.xpose.msra.mxu0 %v741
      %818 = vmatprep.subr.mxu0 0.0
      %819 = vmatpush1.xpose.msra.mxu0 %v744
      %820 = vmatprep.subr.mxu0 0.0
      %821 = vmatpush1.xpose.msra.mxu0 %v747
      %822 = vmatprep.subr.mxu0 0.0
      %823 = vmatpush1.xpose.msra.mxu0 %v750
      %824 = vmatprep.subr.mxu0 0.0
      %825 = vmatpush1.xpose.msra.mxu0 %v753
      %826 = vmatprep.subr.mxu0 0.0
      %827 = vmatpush1.xpose.msra.mxu0 %v756
      %828 = vmatprep.subr.mxu0 0.0
      %829 = vmatpush1.xpose.msra.mxu0 %v759
      %830 = vmatprep.subr.mxu0 0.0
      %831 = vmatpush1.xpose.msra.mxu0 %v762
      %832 = vmatprep.subr.mxu0 0.0
      %833 = vmatpush1.xpose.msra.mxu0 %v765
      %834 = vmatprep.subr.mxu0 0.0
      %835 = vmatpush1.xpose.msra.mxu0 %v768
      %836 = vmatprep.subr.mxu0 0.0
      %837 = vmatpush1.xpose.msra.mxu0 %v771
      %838 = vmatprep.subr.mxu0 0.0
      %839 = vmatpush1.xpose.msra.mxu0 %v774
      %840 = vmatprep.mubr.f32.mxu0 0.0
      %841 = vmatmul.mubr.f32.gmra.mrb[0].mxu0 %v585
      %v842 = vpop.f32.mrb[0].mxu0
      %v843 = vadd.f32 0.0, %v842
      %v844 = vpop.f32.mrb[0].mxu0
      %v845 = vadd.f32 0.0, %v844
      %846 = vmatprep.mubr.f32.mxu0 0.0
      %847 = vmatmul.mubr.f32.gmra.mrb[0].mxu0 %v588
      %v848 = vpop.f32.mrb[0].mxu0
      %v849 = vadd.f32 0.0, %v848
      %v850 = vpop.f32.mrb[0].mxu0
      %v851 = vadd.f32 0.0, %v850
      %852 = vmatprep.mubr.f32.mxu0 0.0
      %853 = vmatmul.mubr.f32.gmra.mrb[0].mxu0 %v591
      %v854 = vpop.f32.mrb[0].mxu0
      %v855 = vadd.f32 0.0, %v854
      %v856 = vpop.f32.mrb[0].mxu0
      %v857 = vadd.f32 0.0, %v856
      %858 = vmatprep.mubr.f32.mxu0 0.0
      %859 = vmatmul.mubr.f32.gmra.mrb[0].mxu0 %v594
      %v860 = vpop.f32.mrb[0].mxu0
      %v861 = vadd.f32 0.0, %v860
      %v862 = vpop.f32.mrb[0].mxu0
      %v863 = vadd.f32 0.0, %v862
      %864 = vmatprep.mubr.f32.mxu0 0.0
      %865 = vmatmul.mubr.f32.gmra.mrb[0].mxu0 %v597
      %v866 = vpop.f32.mrb[0].mxu0
      %v867 = vadd.f32 0.0, %v866
      %v868 = vpop.f32.mrb[0].mxu0
      %v869 = vadd.f32 0.0, %v868
      %870 = vmatprep.mubr.f32.mxu0 0.0
      %871 = vmatmul.mubr.f32.gmra.mrb[0].mxu0 %v600
      %v872 = vpop.f32.mrb[0].mxu0
      %v873 = vadd.f32 0.0, %v872
      %v874 = vpop.f32.mrb[0].mxu0
      %v875 = vadd.f32 0.0, %v874
      %876 = vmatprep.mubr.f32.mxu0 0.0
      %877 = vmatmul.mubr.f32.gmra.mrb[0].mxu0 %v603
      %v878 = vpop.f32.mrb[0].mxu0
      %v879 = vadd.f32 0.0, %v878
      %v880 = vpop.f32.mrb[0].mxu0
      %v881 = vadd.f32 0.0, %v880
      %882 = vmatprep.mubr.f32.mxu0 0.0
      %883 = vmatmul.mubr.f32.gmra.mrb[0].mxu0 %v606
      %v884 = vpop.f32.mrb[0].mxu0
      %v885 = vadd.f32 0.0, %v884
      %v886 = vpop.f32.mrb[0].mxu0
      %v887 = vadd.f32 0.0, %v886
      %888 = vmatprep.mubr.f32.mxu0 0.0
      %889 = vmatmul.mubr.f32.gmra.mrb[0].mxu0 %v609
      %v890 = vpop.f32.mrb[0].mxu0
      %v891 = vadd.f32 0.0, %v890
      %v892 = vpop.f32.mrb[0].mxu0
      %v893 = vadd.f32 0.0, %v892
      %894 = vmatprep.mubr.f32.mxu0 0.0
      %895 = vmatmul.mubr.f32.gmra.mrb[0].mxu0 %v612
      %v896 = vpop.f32.mrb[0].mxu0
      %v897 = vadd.f32 0.0, %v896
      %v898 = vpop.f32.mrb[0].mxu0
      %v899 = vadd.f32 0.0, %v898
      %900 = vmatprep.mubr.f32.mxu0 0.0
      %901 = vmatmul.mubr.f32.gmra.mrb[0].mxu0 %v615
      %v902 = vpop.f32.mrb[0].mxu0
      %v903 = vadd.f32 0.0, %v902
      %v904 = vpop.f32.mrb[0].mxu0
      %v905 = vadd.f32 0.0, %v904
      %906 = vmatprep.mubr.f32.mxu0 0.0
      %907 = vmatmul.mubr.f32.gmra.mrb[0].mxu0 %v618
      %v908 = vpop.f32.mrb[0].mxu0
      %v909 = vadd.f32 0.0, %v908
      %v910 = vpop.f32.mrb[0].mxu0
      %v911 = vadd.f32 0.0, %v910
      %912 = vmatprep.mubr.f32.mxu0 0.0
      %913 = vmatmul.mubr.f32.gmra.mrb[0].mxu0 %v621
      %v914 = vpop.f32.mrb[0].mxu0
      %v915 = vadd.f32 0.0, %v914
      %v916 = vpop.f32.mrb[0].mxu0
      %v917 = vadd.f32 0.0, %v916
      %918 = vmatprep.mubr.f32.mxu0 0.0
      %919 = vmatmul.mubr.f32.gmra.mrb[0].mxu0 %v624
      %v920 = vpop.f32.mrb[0].mxu0
      %v921 = vadd.f32 0.0, %v920
      %v922 = vpop.f32.mrb[0].mxu0
      %v923 = vadd.f32 0.0, %v922
      %924 = vmatprep.mubr.f32.mxu0 0.0
      %925 = vmatmul.mubr.f32.gmra.mrb[0].mxu0 %v627
      %v926 = vpop.f32.mrb[0].mxu0
      %v927 = vadd.f32 0.0, %v926
      %v928 = vpop.f32.mrb[0].mxu0
      %v929 = vadd.f32 0.0, %v928
      %930 = vmatprep.mubr.f32.mxu0 0.0
      %931 = vmatmul.mubr.f32.gmra.mrb[0].mxu0 %v630
      %v932 = vpop.f32.mrb[0].mxu0
      %v933 = vadd.f32 0.0, %v932
      %v934 = vpop.f32.mrb[0].mxu0
      %v935 = vadd.f32 0.0, %v934
      %936 = vmatprep.mubr.f32.mxu0 0.0
      %937 = vmatmul.mubr.f32.gmra.mrb[0].mxu0 %v633
      %v938 = vpop.f32.mrb[0].mxu0
      %v939 = vadd.f32 0.0, %v938
      %v940 = vpop.f32.mrb[0].mxu0
      %v941 = vadd.f32 0.0, %v940
      %942 = vmatprep.mubr.f32.mxu0 0.0
      %943 = vmatmul.mubr.f32.gmra.mrb[0].mxu0 %v636
      %v944 = vpop.f32.mrb[0].mxu0
      %v945 = vadd.f32 0.0, %v944
      %v946 = vpop.f32.mrb[0].mxu0
      %v947 = vadd.f32 0.0, %v946
      %948 = vmatprep.mubr.f32.mxu0 0.0
      %949 = vmatmul.mubr.f32.gmra.mrb[0].mxu0 %v639
      %v950 = vpop.f32.mrb[0].mxu0
      %v951 = vadd.f32 0.0, %v950
      %v952 = vpop.f32.mrb[0].mxu0
      %v953 = vadd.f32 0.0, %v952
      %954 = vmatprep.mubr.f32.mxu0 0.0
      %955 = vmatmul.mubr.f32.gmra.mrb[0].mxu0 %v642
      %v956 = vpop.f32.mrb[0].mxu0
      %v957 = vadd.f32 0.0, %v956
      %v958 = vpop.f32.mrb[0].mxu0
      %v959 = vadd.f32 0.0, %v958
      %960 = vmatprep.mubr.f32.mxu0 0.0
      %961 = vmatmul.mubr.f32.gmra.mrb[0].mxu0 %v645
      %v962 = vpop.f32.mrb[0].mxu0
      %v963 = vadd.f32 0.0, %v962
      %v964 = vpop.f32.mrb[0].mxu0
      %v965 = vadd.f32 0.0, %v964
      %966 = vmatprep.mubr.f32.mxu0 0.0
      %967 = vmatmul.mubr.f32.gmra.mrb[0].mxu0 %v648
      %v968 = vpop.f32.mrb[0].mxu0
      %v969 = vadd.f32 0.0, %v968
      %v970 = vpop.f32.mrb[0].mxu0
      %v971 = vadd.f32 0.0, %v970
      %972 = vmatprep.mubr.f32.mxu0 0.0
      %973 = vmatmul.mubr.f32.gmra.mrb[0].mxu0 %v651
      %v974 = vpop.f32.mrb[0].mxu0
      %v975 = vadd.f32 0.0, %v974
      %v976 = vpop.f32.mrb[0].mxu0
      %v977 = vadd.f32 0.0, %v976
      %978 = vmatprep.mubr.f32.mxu0 0.0
      %979 = vmatmul.mubr.f32.gmra.mrb[0].mxu0 %v654
      %v980 = vpop.f32.mrb[0].mxu0
      %v981 = vadd.f32 0.0, %v980
      %v982 = vpop.f32.mrb[0].mxu0
      %v983 = vadd.f32 0.0, %v982
      %984 = vmatprep.mubr.f32.mxu0 0.0
      %985 = vmatmul.mubr.f32.gmra.mrb[0].mxu0 %v657
      %v986 = vpop.f32.mrb[0].mxu0
      %v987 = vadd.f32 0.0, %v986
      %v988 = vpop.f32.mrb[0].mxu0
      %v989 = vadd.f32 0.0, %v988
      %990 = vmatprep.mubr.f32.mxu0 0.0
      %991 = vmatmul.mubr.f32.gmra.mrb[0].mxu0 %v660
      %v992 = vpop.f32.mrb[0].mxu0
      %v993 = vadd.f32 0.0, %v992
      %v994 = vpop.f32.mrb[0].mxu0
      %v995 = vadd.f32 0.0, %v994
      %996 = vmatprep.mubr.f32.mxu0 0.0
      %997 = vmatmul.mubr.f32.gmra.mrb[0].mxu0 %v663
      %v998 = vpop.f32.mrb[0].mxu0
      %v999 = vadd.f32 0.0, %v998
      %v1000 = vpop.f32.mrb[0].mxu0
      %v1001 = vadd.f32 0.0, %v1000
      %1002 = vmatprep.mubr.f32.mxu0 0.0
      %1003 = vmatmul.mubr.f32.gmra.mrb[0].mxu0 %v666
      %v1004 = vpop.f32.mrb[0].mxu0
      %v1005 = vadd.f32 0.0, %v1004
      %v1006 = vpop.f32.mrb[0].mxu0
      %v1007 = vadd.f32 0.0, %v1006
      %1008 = vmatprep.mubr.f32.mxu0 0.0
      %1009 = vmatmul.mubr.f32.gmra.mrb[0].mxu0 %v669
      %v1010 = vpop.f32.mrb[0].mxu0
      %v1011 = vadd.f32 0.0, %v1010
      %v1012 = vpop.f32.mrb[0].mxu0
      %v1013 = vadd.f32 0.0, %v1012
      %1014 = vmatprep.mubr.f32.mxu0 0.0
      %1015 = vmatmul.mubr.f32.gmra.mrb[0].mxu0 %v672
      %v1016 = vpop.f32.mrb[0].mxu0
      %v1017 = vadd.f32 0.0, %v1016
      %v1018 = vpop.f32.mrb[0].mxu0
      %v1019 = vadd.f32 0.0, %v1018
      %1020 = vmatprep.mubr.f32.mxu0 0.0
      %1021 = vmatmul.mubr.f32.gmra.mrb[0].mxu0 %v675
      %v1022 = vpop.f32.mrb[0].mxu0
      %v1023 = vadd.f32 0.0, %v1022
      %v1024 = vpop.f32.mrb[0].mxu0
      %v1025 = vadd.f32 0.0, %v1024
      %1026 = vmatprep.mubr.f32.mxu0 0.0
      %1027 = vmatmul.mubr.f32.gmra.mrb[0].mxu0 %v678
      %v1028 = vpop.f32.mrb[0].mxu0
      %v1029 = vadd.f32 0.0, %v1028
      %v1030 = vpop.f32.mrb[0].mxu0
      %v1031 = vadd.f32 0.0, %v1030
      %1032 = vdwg.mxu0
      %v1033 = vld [vmem:[#allocation3] sm:$0xff]
      %v1034 = vld [vmem:[#allocation3 + $0x8] sm:$0xff]
      %v1035 = vld [vmem:[#allocation3 + $0x10] sm:$0xff]
      %v1036 = vld [vmem:[#allocation3 + $0x18] sm:$0xff]
      %v1037 = vld [vmem:[#allocation3 + $0x20] sm:$0xff]
      %v1038 = vld [vmem:[#allocation3 + $0x28] sm:$0xff]
      %v1039 = vld [vmem:[#allocation3 + $0x30] sm:$0xff]
      %v1040 = vld [vmem:[#allocation3 + $0x38] sm:$0xff]
      %v1041 = vld [vmem:[#allocation3 + $0x40] sm:$0xff]
      %v1042 = vld [vmem:[#allocation3 + $0x48] sm:$0xff]
      %v1043 = vld [vmem:[#allocation3 + $0x50] sm:$0xff]
      %v1044 = vld [vmem:[#allocation3 + $0x58] sm:$0xff]
      %v1045 = vld [vmem:[#allocation3 + $0x60] sm:$0xff]
      %v1046 = vld [vmem:[#allocation3 + $0x68] sm:$0xff]
      %v1047 = vld [vmem:[#allocation3 + $0x70] sm:$0xff]
      %v1048 = vld [vmem:[#allocation3 + $0x78] sm:$0xff]
      %v1049 = vld [vmem:[#allocation3 + $0x80] sm:$0xff]
      %v1050 = vld [vmem:[#allocation3 + $0x88] sm:$0xff]
      %v1051 = vld [vmem:[#allocation3 + $0x90] sm:$0xff]
      %v1052 = vld [vmem:[#allocation3 + $0x98] sm:$0xff]
      %v1053 = vld [vmem:[#allocation3 + $0xa0] sm:$0xff]
      %v1054 = vld [vmem:[#allocation3 + $0xa8] sm:$0xff]
      %v1055 = vld [vmem:[#allocation3 + $0xb0] sm:$0xff]
      %v1056 = vld [vmem:[#allocation3 + $0xb8] sm:$0xff]
      %v1057 = vld [vmem:[#allocation3 + $0xc0] sm:$0xff]
      %v1058 = vld [vmem:[#allocation3 + $0xc8] sm:$0xff]
      %v1059 = vld [vmem:[#allocation3 + $0xd0] sm:$0xff]
      %v1060 = vld [vmem:[#allocation3 + $0xd8] sm:$0xff]
      %v1061 = vld [vmem:[#allocation3 + $0xe0] sm:$0xff]
      %v1062 = vld [vmem:[#allocation3 + $0xe8] sm:$0xff]
      %v1063 = vld [vmem:[#allocation3 + $0xf0] sm:$0xff]
      %v1064 = vld [vmem:[#allocation3 + $0xf8] sm:$0xff]
      %v1065 = vmax.f32 %v843, %v845
      %1066 = vmax.xlane.f32.xlu0 %v1065
      %v1067 = vpop.xlane.xlu0 %1066
      %v1068 = vmax.f32 %v849, %v851
      %1069 = vmax.xlane.f32.xlu0 %v1068
      %v1070 = vpop.xlane.xlu0 %1069
      %v1071 = vmax.f32 %v855, %v857
      %1072 = vmax.xlane.f32.xlu0 %v1071
      %v1073 = vpop.xlane.xlu0 %1072
      %v1074 = vmax.f32 %v861, %v863
      %1075 = vmax.xlane.f32.xlu0 %v1074
      %v1076 = vpop.xlane.xlu0 %1075
      %v1077 = vmax.f32 %v867, %v869
      %1078 = vmax.xlane.f32.xlu0 %v1077
      %v1079 = vpop.xlane.xlu0 %1078
      %v1080 = vmax.f32 %v873, %v875
      %1081 = vmax.xlane.f32.xlu0 %v1080
      %v1082 = vpop.xlane.xlu0 %1081
      %v1083 = vmax.f32 %v879, %v881
      %1084 = vmax.xlane.f32.xlu0 %v1083
      %v1085 = vpop.xlane.xlu0 %1084
      %v1086 = vmax.f32 %v885, %v887
      %1087 = vmax.xlane.f32.xlu0 %v1086
      %v1088 = vpop.xlane.xlu0 %1087
      %v1089 = vmax.f32 %v891, %v893
      %1090 = vmax.xlane.f32.xlu0 %v1089
      %v1091 = vpop.xlane.xlu0 %1090
      %v1092 = vmax.f32 %v897, %v899
      %1093 = vmax.xlane.f32.xlu0 %v1092
      %v1094 = vpop.xlane.xlu0 %1093
      %v1095 = vmax.f32 %v903, %v905
      %1096 = vmax.xlane.f32.xlu0 %v1095
      %v1097 = vpop.xlane.xlu0 %1096
      %v1098 = vmax.f32 %v909, %v911
      %1099 = vmax.xlane.f32.xlu0 %v1098
      %v1100 = vpop.xlane.xlu0 %1099
      %v1101 = vmax.f32 %v915, %v917
      %1102 = vmax.xlane.f32.xlu0 %v1101
      %v1103 = vpop.xlane.xlu0 %1102
      %v1104 = vmax.f32 %v921, %v923
      %1105 = vmax.xlane.f32.xlu0 %v1104
      %v1106 = vpop.xlane.xlu0 %1105
      %v1107 = vmax.f32 %v927, %v929
      %1108 = vmax.xlane.f32.xlu0 %v1107
      %v1109 = vpop.xlane.xlu0 %1108
      %v1110 = vmax.f32 %v933, %v935
      %1111 = vmax.xlane.f32.xlu0 %v1110
      %v1112 = vpop.xlane.xlu0 %1111
      %v1113 = vmax.f32 %v939, %v941
      %1114 = vmax.xlane.f32.xlu0 %v1113
      %v1115 = vpop.xlane.xlu0 %1114
      %v1116 = vmax.f32 %v945, %v947
      %1117 = vmax.xlane.f32.xlu0 %v1116
      %v1118 = vpop.xlane.xlu0 %1117
      %v1119 = vmax.f32 %v951, %v953
      %1120 = vmax.xlane.f32.xlu0 %v1119
      %v1121 = vpop.xlane.xlu0 %1120
      %v1122 = vmax.f32 %v957, %v959
      %1123 = vmax.xlane.f32.xlu0 %v1122
      %v1124 = vpop.xlane.xlu0 %1123
      %v1125 = vmax.f32 %v963, %v965
      %1126 = vmax.xlane.f32.xlu0 %v1125
      %v1127 = vpop.xlane.xlu0 %1126
      %v1128 = vmax.f32 %v969, %v971
      %1129 = vmax.xlane.f32.xlu0 %v1128
      %v1130 = vpop.xlane.xlu0 %1129
      %v1131 = vmax.f32 %v975, %v977
      %1132 = vmax.xlane.f32.xlu0 %v1131
      %v1133 = vpop.xlane.xlu0 %1132
      %v1134 = vmax.f32 %v981, %v983
      %1135 = vmax.xlane.f32.xlu0 %v1134
      %v1136 = vpop.xlane.xlu0 %1135
      %v1137 = vmax.f32 %v987, %v989
      %1138 = vmax.xlane.f32.xlu0 %v1137
      %v1139 = vpop.xlane.xlu0 %1138
      %v1140 = vmax.f32 %v993, %v995
      %1141 = vmax.xlane.f32.xlu0 %v1140
      %v1142 = vpop.xlane.xlu0 %1141
      %v1143 = vmax.f32 %v999, %v1001
      %1144 = vmax.xlane.f32.xlu0 %v1143
      %v1145 = vpop.xlane.xlu0 %1144
      %v1146 = vmax.f32 %v1005, %v1007
      %1147 = vmax.xlane.f32.xlu0 %v1146
      %v1148 = vpop.xlane.xlu0 %1147
      %v1149 = vmax.f32 %v1011, %v1013
      %1150 = vmax.xlane.f32.xlu0 %v1149
      %v1151 = vpop.xlane.xlu0 %1150
      %v1152 = vmax.f32 %v1017, %v1019
      %1153 = vmax.xlane.f32.xlu0 %v1152
      %v1154 = vpop.xlane.xlu0 %1153
      %v1155 = vmax.f32 %v1023, %v1025
      %1156 = vmax.xlane.f32.xlu0 %v1155
      %v1157 = vpop.xlane.xlu0 %1156
      %v1158 = vmax.f32 %v1029, %v1031
      %1159 = vmax.xlane.f32.xlu0 %v1158
      %v1160 = vpop.xlane.xlu0 %1159
      %v1161 = vmax.f32 %v1033, %v1067
      %v1162 = vmax.f32 %v1034, %v1070
      %v1163 = vmax.f32 %v1035, %v1073
      %v1164 = vmax.f32 %v1036, %v1076
      %v1165 = vmax.f32 %v1037, %v1079
      %v1166 = vmax.f32 %v1038, %v1082
      %v1167 = vmax.f32 %v1039, %v1085
      %v1168 = vmax.f32 %v1040, %v1088
      %v1169 = vmax.f32 %v1041, %v1091
      %v1170 = vmax.f32 %v1042, %v1094
      %v1171 = vmax.f32 %v1043, %v1097
      %v1172 = vmax.f32 %v1044, %v1100
      %v1173 = vmax.f32 %v1045, %v1103
      %v1174 = vmax.f32 %v1046, %v1106
      %v1175 = vmax.f32 %v1047, %v1109
      %v1176 = vmax.f32 %v1048, %v1112
      %v1177 = vmax.f32 %v1049, %v1115
      %v1178 = vmax.f32 %v1050, %v1118
      %v1179 = vmax.f32 %v1051, %v1121
      %v1180 = vmax.f32 %v1052, %v1124
      %v1181 = vmax.f32 %v1053, %v1127
      %v1182 = vmax.f32 %v1054, %v1130
      %v1183 = vmax.f32 %v1055, %v1133
      %v1184 = vmax.f32 %v1056, %v1136
      %v1185 = vmax.f32 %v1057, %v1139
      %v1186 = vmax.f32 %v1058, %v1142
      %v1187 = vmax.f32 %v1059, %v1145
      %v1188 = vmax.f32 %v1060, %v1148
      %v1189 = vmax.f32 %v1061, %v1151
      %v1190 = vmax.f32 %v1062, %v1154
      %v1191 = vmax.f32 %v1063, %v1157
      %v1192 = vmax.f32 %v1064, %v1160
      %v1193 = vsub.f32 %v1033, %v1161
      %v1194 = vsub.f32 %v1034, %v1162
      %v1195 = vsub.f32 %v1035, %v1163
      %v1196 = vsub.f32 %v1036, %v1164
      %v1197 = vsub.f32 %v1037, %v1165
      %v1198 = vsub.f32 %v1038, %v1166
      %v1199 = vsub.f32 %v1039, %v1167
      %v1200 = vsub.f32 %v1040, %v1168
      %v1201 = vsub.f32 %v1041, %v1169
      %v1202 = vsub.f32 %v1042, %v1170
      %v1203 = vsub.f32 %v1043, %v1171
      %v1204 = vsub.f32 %v1044, %v1172
      %v1205 = vsub.f32 %v1045, %v1173
      %v1206 = vsub.f32 %v1046, %v1174
      %v1207 = vsub.f32 %v1047, %v1175
      %v1208 = vsub.f32 %v1048, %v1176
      %v1209 = vsub.f32 %v1049, %v1177
      %v1210 = vsub.f32 %v1050, %v1178
      %v1211 = vsub.f32 %v1051, %v1179
      %v1212 = vsub.f32 %v1052, %v1180
      %v1213 = vsub.f32 %v1053, %v1181
      %v1214 = vsub.f32 %v1054, %v1182
      %v1215 = vsub.f32 %v1055, %v1183
      %v1216 = vsub.f32 %v1056, %v1184
      %v1217 = vsub.f32 %v1057, %v1185
      %v1218 = vsub.f32 %v1058, %v1186
      %v1219 = vsub.f32 %v1059, %v1187
      %v1220 = vsub.f32 %v1060, %v1188
      %v1221 = vsub.f32 %v1061, %v1189
      %v1222 = vsub.f32 %v1062, %v1190
      %v1223 = vsub.f32 %v1063, %v1191
      %v1224 = vsub.f32 %v1064, %v1192
      %v1225 = vmul.f32 %v1193, 1.442695
      %v1226 = vpow.pop %v1225
      %v1227 = vmul.f32 %v1194, 1.442695
      %v1228 = vpow.pop %v1227
      %v1229 = vmul.f32 %v1195, 1.442695
      %v1230 = vpow.pop %v1229
      %v1231 = vmul.f32 %v1196, 1.442695
      %v1232 = vpow.pop %v1231
      %v1233 = vmul.f32 %v1197, 1.442695
      %v1234 = vpow.pop %v1233
      %v1235 = vmul.f32 %v1198, 1.442695
      %v1236 = vpow.pop %v1235
      %v1237 = vmul.f32 %v1199, 1.442695
      %v1238 = vpow.pop %v1237
      %v1239 = vmul.f32 %v1200, 1.442695
      %v1240 = vpow.pop %v1239
      %v1241 = vmul.f32 %v1201, 1.442695
      %v1242 = vpow.pop %v1241
      %v1243 = vmul.f32 %v1202, 1.442695
      %v1244 = vpow.pop %v1243
      %v1245 = vmul.f32 %v1203, 1.442695
      %v1246 = vpow.pop %v1245
      %v1247 = vmul.f32 %v1204, 1.442695
      %v1248 = vpow.pop %v1247
      %v1249 = vmul.f32 %v1205, 1.442695
      %v1250 = vpow.pop %v1249
      %v1251 = vmul.f32 %v1206, 1.442695
      %v1252 = vpow.pop %v1251
      %v1253 = vmul.f32 %v1207, 1.442695
      %v1254 = vpow.pop %v1253
      %v1255 = vmul.f32 %v1208, 1.442695
      %v1256 = vpow.pop %v1255
      %v1257 = vmul.f32 %v1209, 1.442695
      %v1258 = vpow.pop %v1257
      %v1259 = vmul.f32 %v1210, 1.442695
      %v1260 = vpow.pop %v1259
      %v1261 = vmul.f32 %v1211, 1.442695
      %v1262 = vpow.pop %v1261
      %v1263 = vmul.f32 %v1212, 1.442695
      %v1264 = vpow.pop %v1263
      %v1265 = vmul.f32 %v1213, 1.442695
      %v1266 = vpow.pop %v1265
      %v1267 = vmul.f32 %v1214, 1.442695
      %v1268 = vpow.pop %v1267
      %v1269 = vmul.f32 %v1215, 1.442695
      %v1270 = vpow.pop %v1269
      %v1271 = vmul.f32 %v1216, 1.442695
      %v1272 = vpow.pop %v1271
      %v1273 = vmul.f32 %v1217, 1.442695
      %v1274 = vpow.pop %v1273
      %v1275 = vmul.f32 %v1218, 1.442695
      %v1276 = vpow.pop %v1275
      %v1277 = vmul.f32 %v1219, 1.442695
      %v1278 = vpow.pop %v1277
      %v1279 = vmul.f32 %v1220, 1.442695
      %v1280 = vpow.pop %v1279
      %v1281 = vmul.f32 %v1221, 1.442695
      %v1282 = vpow.pop %v1281
      %v1283 = vmul.f32 %v1222, 1.442695
      %v1284 = vpow.pop %v1283
      %v1285 = vmul.f32 %v1223, 1.442695
      %v1286 = vpow.pop %v1285
      %v1287 = vmul.f32 %v1224, 1.442695
      %v1288 = vpow.pop %v1287
      %1290 = vset.pattern.permute.xlu0 0
      %1291 = vperm.xlu0 %1290, %v1161
      %v1292 = vpop.permute.xlu0 %1291
      %1295 = vset.pattern.permute.xlu0 0
      %1296 = vperm.xlu0 %1295, %v1162
      %v1297 = vpop.permute.xlu0 %1296
      %1300 = vset.pattern.permute.xlu0 0
      %1301 = vperm.xlu0 %1300, %v1163
      %v1302 = vpop.permute.xlu0 %1301
      %1305 = vset.pattern.permute.xlu0 0
      %1306 = vperm.xlu0 %1305, %v1164
      %v1307 = vpop.permute.xlu0 %1306
      %1310 = vset.pattern.permute.xlu0 0
      %1311 = vperm.xlu0 %1310, %v1165
      %v1312 = vpop.permute.xlu0 %1311
      %1315 = vset.pattern.permute.xlu0 0
      %1316 = vperm.xlu0 %1315, %v1166
      %v1317 = vpop.permute.xlu0 %1316
      %1320 = vset.pattern.permute.xlu0 0
      %1321 = vperm.xlu0 %1320, %v1167
      %v1322 = vpop.permute.xlu0 %1321
      %1325 = vset.pattern.permute.xlu0 0
      %1326 = vperm.xlu0 %1325, %v1168
      %v1327 = vpop.permute.xlu0 %1326
      %1330 = vset.pattern.permute.xlu0 0
      %1331 = vperm.xlu0 %1330, %v1169
      %v1332 = vpop.permute.xlu0 %1331
      %1335 = vset.pattern.permute.xlu0 0
      %1336 = vperm.xlu0 %1335, %v1170
      %v1337 = vpop.permute.xlu0 %1336
      %1340 = vset.pattern.permute.xlu0 0
      %1341 = vperm.xlu0 %1340, %v1171
      %v1342 = vpop.permute.xlu0 %1341
      %1345 = vset.pattern.permute.xlu0 0
      %1346 = vperm.xlu0 %1345, %v1172
      %v1347 = vpop.permute.xlu0 %1346
      %1350 = vset.pattern.permute.xlu0 0
      %1351 = vperm.xlu0 %1350, %v1173
      %v1352 = vpop.permute.xlu0 %1351
      %1355 = vset.pattern.permute.xlu0 0
      %1356 = vperm.xlu0 %1355, %v1174
      %v1357 = vpop.permute.xlu0 %1356
      %1360 = vset.pattern.permute.xlu0 0
      %1361 = vperm.xlu0 %1360, %v1175
      %v1362 = vpop.permute.xlu0 %1361
      %1365 = vset.pattern.permute.xlu0 0
      %1366 = vperm.xlu0 %1365, %v1176
      %v1367 = vpop.permute.xlu0 %1366
      %1370 = vset.pattern.permute.xlu0 0
      %1371 = vperm.xlu0 %1370, %v1177
      %v1372 = vpop.permute.xlu0 %1371
      %1375 = vset.pattern.permute.xlu0 0
      %1376 = vperm.xlu0 %1375, %v1178
      %v1377 = vpop.permute.xlu0 %1376
      %1380 = vset.pattern.permute.xlu0 0
      %1381 = vperm.xlu0 %1380, %v1179
      %v1382 = vpop.permute.xlu0 %1381
      %1385 = vset.pattern.permute.xlu0 0
      %1386 = vperm.xlu0 %1385, %v1180
      %v1387 = vpop.permute.xlu0 %1386
      %1390 = vset.pattern.permute.xlu0 0
      %1391 = vperm.xlu0 %1390, %v1181
      %v1392 = vpop.permute.xlu0 %1391
      %1395 = vset.pattern.permute.xlu0 0
      %1396 = vperm.xlu0 %1395, %v1182
      %v1397 = vpop.permute.xlu0 %1396
      %1400 = vset.pattern.permute.xlu0 0
      %1401 = vperm.xlu0 %1400, %v1183
      %v1402 = vpop.permute.xlu0 %1401
      %1405 = vset.pattern.permute.xlu0 0
      %1406 = vperm.xlu0 %1405, %v1184
      %v1407 = vpop.permute.xlu0 %1406
      %1410 = vset.pattern.permute.xlu0 0
      %1411 = vperm.xlu0 %1410, %v1185
      %v1412 = vpop.permute.xlu0 %1411
      %1415 = vset.pattern.permute.xlu0 0
      %1416 = vperm.xlu0 %1415, %v1186
      %v1417 = vpop.permute.xlu0 %1416
      %1420 = vset.pattern.permute.xlu0 0
      %1421 = vperm.xlu0 %1420, %v1187
      %v1422 = vpop.permute.xlu0 %1421
      %1425 = vset.pattern.permute.xlu0 0
      %1426 = vperm.xlu0 %1425, %v1188
      %v1427 = vpop.permute.xlu0 %1426
      %1430 = vset.pattern.permute.xlu0 0
      %1431 = vperm.xlu0 %1430, %v1189
      %v1432 = vpop.permute.xlu0 %1431
      %1435 = vset.pattern.permute.xlu0 0
      %1436 = vperm.xlu0 %1435, %v1190
      %v1437 = vpop.permute.xlu0 %1436
      %1440 = vset.pattern.permute.xlu0 0
      %1441 = vperm.xlu0 %1440, %v1191
      %v1442 = vpop.permute.xlu0 %1441
      %1445 = vset.pattern.permute.xlu0 0
      %1446 = vperm.xlu0 %1445, %v1192
      %v1447 = vpop.permute.xlu0 %1446
      %v1449 = vsub.f32 %v843, %v1292
      %v1450 = vsub.f32 %v845, %v1292
      %v1451 = vsub.f32 %v849, %v1297
      %v1452 = vsub.f32 %v851, %v1297
      %v1453 = vsub.f32 %v855, %v1302
      %v1454 = vsub.f32 %v857, %v1302
      %v1455 = vsub.f32 %v861, %v1307
      %v1456 = vsub.f32 %v863, %v1307
      %v1457 = vsub.f32 %v867, %v1312
      %v1458 = vsub.f32 %v869, %v1312
      %v1459 = vsub.f32 %v873, %v1317
      %v1460 = vsub.f32 %v875, %v1317
      %v1461 = vsub.f32 %v879, %v1322
      %v1462 = vsub.f32 %v881, %v1322
      %v1463 = vsub.f32 %v885, %v1327
      %v1464 = vsub.f32 %v887, %v1327
      %v1465 = vsub.f32 %v891, %v1332
      %v1466 = vsub.f32 %v893, %v1332
      %v1467 = vsub.f32 %v897, %v1337
      %v1468 = vsub.f32 %v899, %v1337
      %v1469 = vsub.f32 %v903, %v1342
      %v1470 = vsub.f32 %v905, %v1342
      %v1471 = vsub.f32 %v909, %v1347
      %v1472 = vsub.f32 %v911, %v1347
      %v1473 = vsub.f32 %v915, %v1352
      %v1474 = vsub.f32 %v917, %v1352
      %v1475 = vsub.f32 %v921, %v1357
      %v1476 = vsub.f32 %v923, %v1357
      %v1477 = vsub.f32 %v927, %v1362
      %v1478 = vsub.f32 %v929, %v1362
      %v1479 = vsub.f32 %v933, %v1367
      %v1480 = vsub.f32 %v935, %v1367
      %v1481 = vsub.f32 %v939, %v1372
      %v1482 = vsub.f32 %v941, %v1372
      %v1483 = vsub.f32 %v945, %v1377
      %v1484 = vsub.f32 %v947, %v1377
      %v1485 = vsub.f32 %v951, %v1382
      %v1486 = vsub.f32 %v953, %v1382
      %v1487 = vsub.f32 %v957, %v1387
      %v1488 = vsub.f32 %v959, %v1387
      %v1489 = vsub.f32 %v963, %v1392
      %v1490 = vsub.f32 %v965, %v1392
      %v1491 = vsub.f32 %v969, %v1397
      %v1492 = vsub.f32 %v971, %v1397
      %v1493 = vsub.f32 %v975, %v1402
      %v1494 = vsub.f32 %v977, %v1402
      %v1495 = vsub.f32 %v981, %v1407
      %v1496 = vsub.f32 %v983, %v1407
      %v1497 = vsub.f32 %v987, %v1412
      %v1498 = vsub.f32 %v989, %v1412
      %v1499 = vsub.f32 %v993, %v1417
      %v1500 = vsub.f32 %v995, %v1417
      %v1501 = vsub.f32 %v999, %v1422
      %v1502 = vsub.f32 %v1001, %v1422
      %v1503 = vsub.f32 %v1005, %v1427
      %v1504 = vsub.f32 %v1007, %v1427
      %v1505 = vsub.f32 %v1011, %v1432
      %v1506 = vsub.f32 %v1013, %v1432
      %v1507 = vsub.f32 %v1017, %v1437
      %v1508 = vsub.f32 %v1019, %v1437
      %v1509 = vsub.f32 %v1023, %v1442
      %v1510 = vsub.f32 %v1025, %v1442
      %v1511 = vsub.f32 %v1029, %v1447
      %v1512 = vsub.f32 %v1031, %v1447
      %v1513 = vmul.f32 %v1449, 1.442695
      %v1514 = vpow.pop %v1513
      %v1515 = vmul.f32 %v1450, 1.442695
      %v1516 = vpow.pop %v1515
      %v1517 = vmul.f32 %v1451, 1.442695
      %v1518 = vpow.pop %v1517
      %v1519 = vmul.f32 %v1452, 1.442695
      %v1520 = vpow.pop %v1519
      %v1521 = vmul.f32 %v1453, 1.442695
      %v1522 = vpow.pop %v1521
      %v1523 = vmul.f32 %v1454, 1.442695
      %v1524 = vpow.pop %v1523
      %v1525 = vmul.f32 %v1455, 1.442695
      %v1526 = vpow.pop %v1525
      %v1527 = vmul.f32 %v1456, 1.442695
      %v1528 = vpow.pop %v1527
      %v1529 = vmul.f32 %v1457, 1.442695
      %v1530 = vpow.pop %v1529
      %v1531 = vmul.f32 %v1458, 1.442695
      %v1532 = vpow.pop %v1531
      %v1533 = vmul.f32 %v1459, 1.442695
      %v1534 = vpow.pop %v1533
      %v1535 = vmul.f32 %v1460, 1.442695
      %v1536 = vpow.pop %v1535
      %v1537 = vmul.f32 %v1461, 1.442695
      %v1538 = vpow.pop %v1537
      %v1539 = vmul.f32 %v1462, 1.442695
      %v1540 = vpow.pop %v1539
      %v1541 = vmul.f32 %v1463, 1.442695
      %v1542 = vpow.pop %v1541
      %v1543 = vmul.f32 %v1464, 1.442695
      %v1544 = vpow.pop %v1543
      %v1545 = vmul.f32 %v1465, 1.442695
      %v1546 = vpow.pop %v1545
      %v1547 = vmul.f32 %v1466, 1.442695
      %v1548 = vpow.pop %v1547
      %v1549 = vmul.f32 %v1467, 1.442695
      %v1550 = vpow.pop %v1549
      %v1551 = vmul.f32 %v1468, 1.442695
      %v1552 = vpow.pop %v1551
      %v1553 = vmul.f32 %v1469, 1.442695
      %v1554 = vpow.pop %v1553
      %v1555 = vmul.f32 %v1470, 1.442695
      %v1556 = vpow.pop %v1555
      %v1557 = vmul.f32 %v1471, 1.442695
      %v1558 = vpow.pop %v1557
      %v1559 = vmul.f32 %v1472, 1.442695
      %v1560 = vpow.pop %v1559
      %v1561 = vmul.f32 %v1473, 1.442695
      %v1562 = vpow.pop %v1561
      %v1563 = vmul.f32 %v1474, 1.442695
      %v1564 = vpow.pop %v1563
      %v1565 = vmul.f32 %v1475, 1.442695
      %v1566 = vpow.pop %v1565
      %v1567 = vmul.f32 %v1476, 1.442695
      %v1568 = vpow.pop %v1567
      %v1569 = vmul.f32 %v1477, 1.442695
      %v1570 = vpow.pop %v1569
      %v1571 = vmul.f32 %v1478, 1.442695
      %v1572 = vpow.pop %v1571
      %v1573 = vmul.f32 %v1479, 1.442695
      %v1574 = vpow.pop %v1573
      %v1575 = vmul.f32 %v1480, 1.442695
      %v1576 = vpow.pop %v1575
      %v1577 = vmul.f32 %v1481, 1.442695
      %v1578 = vpow.pop %v1577
      %v1579 = vmul.f32 %v1482, 1.442695
      %v1580 = vpow.pop %v1579
      %v1581 = vmul.f32 %v1483, 1.442695
      %v1582 = vpow.pop %v1581
      %v1583 = vmul.f32 %v1484, 1.442695
      %v1584 = vpow.pop %v1583
      %v1585 = vmul.f32 %v1485, 1.442695
      %v1586 = vpow.pop %v1585
      %v1587 = vmul.f32 %v1486, 1.442695
      %v1588 = vpow.pop %v1587
      %v1589 = vmul.f32 %v1487, 1.442695
      %v1590 = vpow.pop %v1589
      %v1591 = vmul.f32 %v1488, 1.442695
      %v1592 = vpow.pop %v1591
      %v1593 = vmul.f32 %v1489, 1.442695
      %v1594 = vpow.pop %v1593
      %v1595 = vmul.f32 %v1490, 1.442695
      %v1596 = vpow.pop %v1595
      %v1597 = vmul.f32 %v1491, 1.442695
      %v1598 = vpow.pop %v1597
      %v1599 = vmul.f32 %v1492, 1.442695
      %v1600 = vpow.pop %v1599
      %v1601 = vmul.f32 %v1493, 1.442695
      %v1602 = vpow.pop %v1601
      %v1603 = vmul.f32 %v1494, 1.442695
      %v1604 = vpow.pop %v1603
      %v1605 = vmul.f32 %v1495, 1.442695
      %v1606 = vpow.pop %v1605
      %v1607 = vmul.f32 %v1496, 1.442695
      %v1608 = vpow.pop %v1607
      %v1609 = vmul.f32 %v1497, 1.442695
      %v1610 = vpow.pop %v1609
      %v1611 = vmul.f32 %v1498, 1.442695
      %v1612 = vpow.pop %v1611
      %v1613 = vmul.f32 %v1499, 1.442695
      %v1614 = vpow.pop %v1613
      %v1615 = vmul.f32 %v1500, 1.442695
      %v1616 = vpow.pop %v1615
      %v1617 = vmul.f32 %v1501, 1.442695
      %v1618 = vpow.pop %v1617
      %v1619 = vmul.f32 %v1502, 1.442695
      %v1620 = vpow.pop %v1619
      %v1621 = vmul.f32 %v1503, 1.442695
      %v1622 = vpow.pop %v1621
      %v1623 = vmul.f32 %v1504, 1.442695
      %v1624 = vpow.pop %v1623
      %v1625 = vmul.f32 %v1505, 1.442695
      %v1626 = vpow.pop %v1625
      %v1627 = vmul.f32 %v1506, 1.442695
      %v1628 = vpow.pop %v1627
      %v1629 = vmul.f32 %v1507, 1.442695
      %v1630 = vpow.pop %v1629
      %v1631 = vmul.f32 %v1508, 1.442695
      %v1632 = vpow.pop %v1631
      %v1633 = vmul.f32 %v1509, 1.442695
      %v1634 = vpow.pop %v1633
      %v1635 = vmul.f32 %v1510, 1.442695
      %v1636 = vpow.pop %v1635
      %v1637 = vmul.f32 %v1511, 1.442695
      %v1638 = vpow.pop %v1637
      %v1639 = vmul.f32 %v1512, 1.442695
      %v1640 = vpow.pop %v1639
      %v1641 = vld [vmem:[#allocation4] sm:$0xff]
      %v1642 = vld [vmem:[#allocation4 + $0x8] sm:$0xff]
      %v1643 = vld [vmem:[#allocation4 + $0x10] sm:$0xff]
      %v1644 = vld [vmem:[#allocation4 + $0x18] sm:$0xff]
      %v1645 = vld [vmem:[#allocation4 + $0x20] sm:$0xff]
      %v1646 = vld [vmem:[#allocation4 + $0x28] sm:$0xff]
      %v1647 = vld [vmem:[#allocation4 + $0x30] sm:$0xff]
      %v1648 = vld [vmem:[#allocation4 + $0x38] sm:$0xff]
      %v1649 = vld [vmem:[#allocation4 + $0x40] sm:$0xff]
      %v1650 = vld [vmem:[#allocation4 + $0x48] sm:$0xff]
      %v1651 = vld [vmem:[#allocation4 + $0x50] sm:$0xff]
      %v1652 = vld [vmem:[#allocation4 + $0x58] sm:$0xff]
      %v1653 = vld [vmem:[#allocation4 + $0x60] sm:$0xff]
      %v1654 = vld [vmem:[#allocation4 + $0x68] sm:$0xff]
      %v1655 = vld [vmem:[#allocation4 + $0x70] sm:$0xff]
      %v1656 = vld [vmem:[#allocation4 + $0x78] sm:$0xff]
      %v1657 = vld [vmem:[#allocation4 + $0x80] sm:$0xff]
      %v1658 = vld [vmem:[#allocation4 + $0x88] sm:$0xff]
      %v1659 = vld [vmem:[#allocation4 + $0x90] sm:$0xff]
      %v1660 = vld [vmem:[#allocation4 + $0x98] sm:$0xff]
      %v1661 = vld [vmem:[#allocation4 + $0xa0] sm:$0xff]
      %v1662 = vld [vmem:[#allocation4 + $0xa8] sm:$0xff]
      %v1663 = vld [vmem:[#allocation4 + $0xb0] sm:$0xff]
      %v1664 = vld [vmem:[#allocation4 + $0xb8] sm:$0xff]
      %v1665 = vld [vmem:[#allocation4 + $0xc0] sm:$0xff]
      %v1666 = vld [vmem:[#allocation4 + $0xc8] sm:$0xff]
      %v1667 = vld [vmem:[#allocation4 + $0xd0] sm:$0xff]
      %v1668 = vld [vmem:[#allocation4 + $0xd8] sm:$0xff]
      %v1669 = vld [vmem:[#allocation4 + $0xe0] sm:$0xff]
      %v1670 = vld [vmem:[#allocation4 + $0xe8] sm:$0xff]
      %v1671 = vld [vmem:[#allocation4 + $0xf0] sm:$0xff]
      %v1672 = vld [vmem:[#allocation4 + $0xf8] sm:$0xff]
      %v1673 = vmul.f32 %v1226, %v1641
      %v1674 = vmul.f32 %v1228, %v1642
      %v1675 = vmul.f32 %v1230, %v1643
      %v1676 = vmul.f32 %v1232, %v1644
      %v1677 = vmul.f32 %v1234, %v1645
      %v1678 = vmul.f32 %v1236, %v1646
      %v1679 = vmul.f32 %v1238, %v1647
      %v1680 = vmul.f32 %v1240, %v1648
      %v1681 = vmul.f32 %v1242, %v1649
      %v1682 = vmul.f32 %v1244, %v1650
      %v1683 = vmul.f32 %v1246, %v1651
      %v1684 = vmul.f32 %v1248, %v1652
      %v1685 = vmul.f32 %v1250, %v1653
      %v1686 = vmul.f32 %v1252, %v1654
      %v1687 = vmul.f32 %v1254, %v1655
      %v1688 = vmul.f32 %v1256, %v1656
      %v1689 = vmul.f32 %v1258, %v1657
      %v1690 = vmul.f32 %v1260, %v1658
      %v1691 = vmul.f32 %v1262, %v1659
      %v1692 = vmul.f32 %v1264, %v1660
      %v1693 = vmul.f32 %v1266, %v1661
      %v1694 = vmul.f32 %v1268, %v1662
      %v1695 = vmul.f32 %v1270, %v1663
      %v1696 = vmul.f32 %v1272, %v1664
      %v1697 = vmul.f32 %v1274, %v1665
      %v1698 = vmul.f32 %v1276, %v1666
      %v1699 = vmul.f32 %v1278, %v1667
      %v1700 = vmul.f32 %v1280, %v1668
      %v1701 = vmul.f32 %v1282, %v1669
      %v1702 = vmul.f32 %v1284, %v1670
      %v1703 = vmul.f32 %v1286, %v1671
      %v1704 = vmul.f32 %v1288, %v1672
      %v1705 = vadd.f32 %v1514, %v1516
      %1706 = vadd.xlane.f32.xlu0 %v1705
      %v1707 = vpop.xlane.xlu0 %1706
      %v1708 = vadd.f32 %v1518, %v1520
      %1709 = vadd.xlane.f32.xlu0 %v1708
      %v1710 = vpop.xlane.xlu0 %1709
      %v1711 = vadd.f32 %v1522, %v1524
      %1712 = vadd.xlane.f32.xlu0 %v1711
      %v1713 = vpop.xlane.xlu0 %1712
      %v1714 = vadd.f32 %v1526, %v1528
      %1715 = vadd.xlane.f32.xlu0 %v1714
      %v1716 = vpop.xlane.xlu0 %1715
      %v1717 = vadd.f32 %v1530, %v1532
      %1718 = vadd.xlane.f32.xlu0 %v1717
      %v1719 = vpop.xlane.xlu0 %1718
      %v1720 = vadd.f32 %v1534, %v1536
      %1721 = vadd.xlane.f32.xlu0 %v1720
      %v1722 = vpop.xlane.xlu0 %1721
      %v1723 = vadd.f32 %v1538, %v1540
      %1724 = vadd.xlane.f32.xlu0 %v1723
      %v1725 = vpop.xlane.xlu0 %1724
      %v1726 = vadd.f32 %v1542, %v1544
      %1727 = vadd.xlane.f32.xlu0 %v1726
      %v1728 = vpop.xlane.xlu0 %1727
      %v1729 = vadd.f32 %v1546, %v1548
      %1730 = vadd.xlane.f32.xlu0 %v1729
      %v1731 = vpop.xlane.xlu0 %1730
      %v1732 = vadd.f32 %v1550, %v1552
      %1733 = vadd.xlane.f32.xlu0 %v1732
      %v1734 = vpop.xlane.xlu0 %1733
      %v1735 = vadd.f32 %v1554, %v1556
      %1736 = vadd.xlane.f32.xlu0 %v1735
      %v1737 = vpop.xlane.xlu0 %1736
      %v1738 = vadd.f32 %v1558, %v1560
      %1739 = vadd.xlane.f32.xlu0 %v1738
      %v1740 = vpop.xlane.xlu0 %1739
      %v1741 = vadd.f32 %v1562, %v1564
      %1742 = vadd.xlane.f32.xlu0 %v1741
      %v1743 = vpop.xlane.xlu0 %1742
      %v1744 = vadd.f32 %v1566, %v1568
      %1745 = vadd.xlane.f32.xlu0 %v1744
      %v1746 = vpop.xlane.xlu0 %1745
      %v1747 = vadd.f32 %v1570, %v1572
      %1748 = vadd.xlane.f32.xlu0 %v1747
      %v1749 = vpop.xlane.xlu0 %1748
      %v1750 = vadd.f32 %v1574, %v1576
      %1751 = vadd.xlane.f32.xlu0 %v1750
      %v1752 = vpop.xlane.xlu0 %1751
      %v1753 = vadd.f32 %v1578, %v1580
      %1754 = vadd.xlane.f32.xlu0 %v1753
      %v1755 = vpop.xlane.xlu0 %1754
      %v1756 = vadd.f32 %v1582, %v1584
      %1757 = vadd.xlane.f32.xlu0 %v1756
      %v1758 = vpop.xlane.xlu0 %1757
      %v1759 = vadd.f32 %v1586, %v1588
      %1760 = vadd.xlane.f32.xlu0 %v1759
      %v1761 = vpop.xlane.xlu0 %1760
      %v1762 = vadd.f32 %v1590, %v1592
      %1763 = vadd.xlane.f32.xlu0 %v1762
      %v1764 = vpop.xlane.xlu0 %1763
      %v1765 = vadd.f32 %v1594, %v1596
      %1766 = vadd.xlane.f32.xlu0 %v1765
      %v1767 = vpop.xlane.xlu0 %1766
      %v1768 = vadd.f32 %v1598, %v1600
      %1769 = vadd.xlane.f32.xlu0 %v1768
      %v1770 = vpop.xlane.xlu0 %1769
      %v1771 = vadd.f32 %v1602, %v1604
      %1772 = vadd.xlane.f32.xlu0 %v1771
      %v1773 = vpop.xlane.xlu0 %1772
      %v1774 = vadd.f32 %v1606, %v1608
      %1775 = vadd.xlane.f32.xlu0 %v1774
      %v1776 = vpop.xlane.xlu0 %1775
      %v1777 = vadd.f32 %v1610, %v1612
      %1778 = vadd.xlane.f32.xlu0 %v1777
      %v1779 = vpop.xlane.xlu0 %1778
      %v1780 = vadd.f32 %v1614, %v1616
      %1781 = vadd.xlane.f32.xlu0 %v1780
      %v1782 = vpop.xlane.xlu0 %1781
      %v1783 = vadd.f32 %v1618, %v1620
      %1784 = vadd.xlane.f32.xlu0 %v1783
      %v1785 = vpop.xlane.xlu0 %1784
      %v1786 = vadd.f32 %v1622, %v1624
      %1787 = vadd.xlane.f32.xlu0 %v1786
      %v1788 = vpop.xlane.xlu0 %1787
      %v1789 = vadd.f32 %v1626, %v1628
      %1790 = vadd.xlane.f32.xlu0 %v1789
      %v1791 = vpop.xlane.xlu0 %1790
      %v1792 = vadd.f32 %v1630, %v1632
      %1793 = vadd.xlane.f32.xlu0 %v1792
      %v1794 = vpop.xlane.xlu0 %1793
      %v1795 = vadd.f32 %v1634, %v1636
      %1796 = vadd.xlane.f32.xlu0 %v1795
      %v1797 = vpop.xlane.xlu0 %1796
      %v1798 = vadd.f32 %v1638, %v1640
      %1799 = vadd.xlane.f32.xlu0 %v1798
      %v1800 = vpop.xlane.xlu0 %1799
      %v1801 = vadd.f32 %v1673, %v1707
      %v1802 = vadd.f32 %v1674, %v1710
      %v1803 = vadd.f32 %v1675, %v1713
      %v1804 = vadd.f32 %v1676, %v1716
      %v1805 = vadd.f32 %v1677, %v1719
      %v1806 = vadd.f32 %v1678, %v1722
      %v1807 = vadd.f32 %v1679, %v1725
      %v1808 = vadd.f32 %v1680, %v1728
      %v1809 = vadd.f32 %v1681, %v1731
      %v1810 = vadd.f32 %v1682, %v1734
      %v1811 = vadd.f32 %v1683, %v1737
      %v1812 = vadd.f32 %v1684, %v1740
      %v1813 = vadd.f32 %v1685, %v1743
      %v1814 = vadd.f32 %v1686, %v1746
      %v1815 = vadd.f32 %v1687, %v1749
      %v1816 = vadd.f32 %v1688, %v1752
      %v1817 = vadd.f32 %v1689, %v1755
      %v1818 = vadd.f32 %v1690, %v1758
      %v1819 = vadd.f32 %v1691, %v1761
      %v1820 = vadd.f32 %v1692, %v1764
      %v1821 = vadd.f32 %v1693, %v1767
      %v1822 = vadd.f32 %v1694, %v1770
      %v1823 = vadd.f32 %v1695, %v1773
      %v1824 = vadd.f32 %v1696, %v1776
      %v1825 = vadd.f32 %v1697, %v1779
      %v1826 = vadd.f32 %v1698, %v1782
      %v1827 = vadd.f32 %v1699, %v1785
      %v1828 = vadd.f32 %v1700, %v1788
      %v1829 = vadd.f32 %v1701, %v1791
      %v1830 = vadd.f32 %v1702, %v1794
      %v1831 = vadd.f32 %v1703, %v1797
      %v1832 = vadd.f32 %v1704, %v1800
      %vm1833 = vcmask 7168
      %1834 = vst.msk [vmem:[#allocation4] sm:$0xff] %vm1833, %v1801
      %1835 = vst.msk [vmem:[#allocation4 + $0x8] sm:$0xff] %vm1833, %v1802
      %1836 = vst.msk [vmem:[#allocation4 + $0x10] sm:$0xff] %vm1833, %v1803
      %1837 = vst.msk [vmem:[#allocation4 + $0x18] sm:$0xff] %vm1833, %v1804
      %1838 = vst.msk [vmem:[#allocation4 + $0x20] sm:$0xff] %vm1833, %v1805
      %1839 = vst.msk [vmem:[#allocation4 + $0x28] sm:$0xff] %vm1833, %v1806
      %1840 = vst.msk [vmem:[#allocation4 + $0x30] sm:$0xff] %vm1833, %v1807
      %1841 = vst.msk [vmem:[#allocation4 + $0x38] sm:$0xff] %vm1833, %v1808
      %1842 = vst.msk [vmem:[#allocation4 + $0x40] sm:$0xff] %vm1833, %v1809
      %1843 = vst.msk [vmem:[#allocation4 + $0x48] sm:$0xff] %vm1833, %v1810
      %1844 = vst.msk [vmem:[#allocation4 + $0x50] sm:$0xff] %vm1833, %v1811
      %1845 = vst.msk [vmem:[#allocation4 + $0x58] sm:$0xff] %vm1833, %v1812
      %1846 = vst.msk [vmem:[#allocation4 + $0x60] sm:$0xff] %vm1833, %v1813
      %1847 = vst.msk [vmem:[#allocation4 + $0x68] sm:$0xff] %vm1833, %v1814
      %1848 = vst.msk [vmem:[#allocation4 + $0x70] sm:$0xff] %vm1833, %v1815
      %1849 = vst.msk [vmem:[#allocation4 + $0x78] sm:$0xff] %vm1833, %v1816
      %1850 = vst.msk [vmem:[#allocation4 + $0x80] sm:$0xff] %vm1833, %v1817
      %1851 = vst.msk [vmem:[#allocation4 + $0x88] sm:$0xff] %vm1833, %v1818
      %1852 = vst.msk [vmem:[#allocation4 + $0x90] sm:$0xff] %vm1833, %v1819
      %1853 = vst.msk [vmem:[#allocation4 + $0x98] sm:$0xff] %vm1833, %v1820
      %1854 = vst.msk [vmem:[#allocation4 + $0xa0] sm:$0xff] %vm1833, %v1821
      %1855 = vst.msk [vmem:[#allocation4 + $0xa8] sm:$0xff] %vm1833, %v1822
      %1856 = vst.msk [vmem:[#allocation4 + $0xb0] sm:$0xff] %vm1833, %v1823
      %1857 = vst.msk [vmem:[#allocation4 + $0xb8] sm:$0xff] %vm1833, %v1824
      %1858 = vst.msk [vmem:[#allocation4 + $0xc0] sm:$0xff] %vm1833, %v1825
      %1859 = vst.msk [vmem:[#allocation4 + $0xc8] sm:$0xff] %vm1833, %v1826
      %1860 = vst.msk [vmem:[#allocation4 + $0xd0] sm:$0xff] %vm1833, %v1827
      %1861 = vst.msk [vmem:[#allocation4 + $0xd8] sm:$0xff] %vm1833, %v1828
      %1862 = vst.msk [vmem:[#allocation4 + $0xe0] sm:$0xff] %vm1833, %v1829
      %1863 = vst.msk [vmem:[#allocation4 + $0xe8] sm:$0xff] %vm1833, %v1830
      %1864 = vst.msk [vmem:[#allocation4 + $0xf0] sm:$0xff] %vm1833, %v1831
      %1865 = vst.msk [vmem:[#allocation4 + $0xf8] sm:$0xff] %vm1833, %v1832
      %v1866 = vld [vmem:[#allocation5] sm:$0xff]
      %v1867 = vld [vmem:[#allocation5 + $0x8] sm:$0xff]
      %v1868 = vld [vmem:[#allocation5 + $0x10] sm:$0xff]
      %v1869 = vld [vmem:[#allocation5 + $0x18] sm:$0xff]
      %v1870 = vld [vmem:[#allocation5 + $0x20] sm:$0xff]
      %v1871 = vld [vmem:[#allocation5 + $0x28] sm:$0xff]
      %v1872 = vld [vmem:[#allocation5 + $0x30] sm:$0xff]
      %v1873 = vld [vmem:[#allocation5 + $0x38] sm:$0xff]
      %v1874 = vld [vmem:[#allocation5 + $0x40] sm:$0xff]
      %v1875 = vld [vmem:[#allocation5 + $0x48] sm:$0xff]
      %v1876 = vld [vmem:[#allocation5 + $0x50] sm:$0xff]
      %v1877 = vld [vmem:[#allocation5 + $0x58] sm:$0xff]
      %v1878 = vld [vmem:[#allocation5 + $0x60] sm:$0xff]
      %v1879 = vld [vmem:[#allocation5 + $0x68] sm:$0xff]
      %v1880 = vld [vmem:[#allocation5 + $0x70] sm:$0xff]
      %v1881 = vld [vmem:[#allocation5 + $0x78] sm:$0xff]
      %v1882 = vld [vmem:[#allocation5 + $0x80] sm:$0xff]
      %v1883 = vld [vmem:[#allocation5 + $0x88] sm:$0xff]
      %v1884 = vld [vmem:[#allocation5 + $0x90] sm:$0xff]
      %v1885 = vld [vmem:[#allocation5 + $0x98] sm:$0xff]
      %v1886 = vld [vmem:[#allocation5 + $0xa0] sm:$0xff]
      %v1887 = vld [vmem:[#allocation5 + $0xa8] sm:$0xff]
      %v1888 = vld [vmem:[#allocation5 + $0xb0] sm:$0xff]
      %v1889 = vld [vmem:[#allocation5 + $0xb8] sm:$0xff]
      %v1890 = vld [vmem:[#allocation5 + $0xc0] sm:$0xff]
      %v1891 = vld [vmem:[#allocation5 + $0xc8] sm:$0xff]
      %v1892 = vld [vmem:[#allocation5 + $0xd0] sm:$0xff]
      %v1893 = vld [vmem:[#allocation5 + $0xd8] sm:$0xff]
      %v1894 = vld [vmem:[#allocation5 + $0xe0] sm:$0xff]
      %v1895 = vld [vmem:[#allocation5 + $0xe8] sm:$0xff]
      %v1896 = vld [vmem:[#allocation5 + $0xf0] sm:$0xff]
      %v1897 = vld [vmem:[#allocation5 + $0xf8] sm:$0xff]
      %1899 = vset.pattern.permute.xlu0 0
      %1900 = vperm.xlu0 %1899, %v1226
      %v1901 = vpop.permute.xlu0 %1900
      %1904 = vset.pattern.permute.xlu0 0
      %1905 = vperm.xlu0 %1904, %v1228
      %v1906 = vpop.permute.xlu0 %1905
      %1909 = vset.pattern.permute.xlu0 0
      %1910 = vperm.xlu0 %1909, %v1230
      %v1911 = vpop.permute.xlu0 %1910
      %1914 = vset.pattern.permute.xlu0 0
      %1915 = vperm.xlu0 %1914, %v1232
      %v1916 = vpop.permute.xlu0 %1915
      %1919 = vset.pattern.permute.xlu0 0
      %1920 = vperm.xlu0 %1919, %v1234
      %v1921 = vpop.permute.xlu0 %1920
      %1924 = vset.pattern.permute.xlu0 0
      %1925 = vperm.xlu0 %1924, %v1236
      %v1926 = vpop.permute.xlu0 %1925
      %1929 = vset.pattern.permute.xlu0 0
      %1930 = vperm.xlu0 %1929, %v1238
      %v1931 = vpop.permute.xlu0 %1930
      %1934 = vset.pattern.permute.xlu0 0
      %1935 = vperm.xlu0 %1934, %v1240
      %v1936 = vpop.permute.xlu0 %1935
      %1939 = vset.pattern.permute.xlu0 0
      %1940 = vperm.xlu0 %1939, %v1242
      %v1941 = vpop.permute.xlu0 %1940
      %1944 = vset.pattern.permute.xlu0 0
      %1945 = vperm.xlu0 %1944, %v1244
      %v1946 = vpop.permute.xlu0 %1945
      %1949 = vset.pattern.permute.xlu0 0
      %1950 = vperm.xlu0 %1949, %v1246
      %v1951 = vpop.permute.xlu0 %1950
      %1954 = vset.pattern.permute.xlu0 0
      %1955 = vperm.xlu0 %1954, %v1248
      %v1956 = vpop.permute.xlu0 %1955
      %1959 = vset.pattern.permute.xlu0 0
      %1960 = vperm.xlu0 %1959, %v1250
      %v1961 = vpop.permute.xlu0 %1960
      %1964 = vset.pattern.permute.xlu0 0
      %1965 = vperm.xlu0 %1964, %v1252
      %v1966 = vpop.permute.xlu0 %1965
      %1969 = vset.pattern.permute.xlu0 0
      %1970 = vperm.xlu0 %1969, %v1254
      %v1971 = vpop.permute.xlu0 %1970
      %1974 = vset.pattern.permute.xlu0 0
      %1975 = vperm.xlu0 %1974, %v1256
      %v1976 = vpop.permute.xlu0 %1975
      %1979 = vset.pattern.permute.xlu0 0
      %1980 = vperm.xlu0 %1979, %v1258
      %v1981 = vpop.permute.xlu0 %1980
      %1984 = vset.pattern.permute.xlu0 0
      %1985 = vperm.xlu0 %1984, %v1260
      %v1986 = vpop.permute.xlu0 %1985
      %1989 = vset.pattern.permute.xlu0 0
      %1990 = vperm.xlu0 %1989, %v1262
      %v1991 = vpop.permute.xlu0 %1990
      %1994 = vset.pattern.permute.xlu0 0
      %1995 = vperm.xlu0 %1994, %v1264
      %v1996 = vpop.permute.xlu0 %1995
      %1999 = vset.pattern.permute.xlu0 0
      %2000 = vperm.xlu0 %1999, %v1266
      %v2001 = vpop.permute.xlu0 %2000
      %2004 = vset.pattern.permute.xlu0 0
      %2005 = vperm.xlu0 %2004, %v1268
      %v2006 = vpop.permute.xlu0 %2005
      %2009 = vset.pattern.permute.xlu0 0
      %2010 = vperm.xlu0 %2009, %v1270
      %v2011 = vpop.permute.xlu0 %2010
      %2014 = vset.pattern.permute.xlu0 0
      %2015 = vperm.xlu0 %2014, %v1272
      %v2016 = vpop.permute.xlu0 %2015
      %2019 = vset.pattern.permute.xlu0 0
      %2020 = vperm.xlu0 %2019, %v1274
      %v2021 = vpop.permute.xlu0 %2020
      %2024 = vset.pattern.permute.xlu0 0
      %2025 = vperm.xlu0 %2024, %v1276
      %v2026 = vpop.permute.xlu0 %2025
      %2029 = vset.pattern.permute.xlu0 0
      %2030 = vperm.xlu0 %2029, %v1278
      %v2031 = vpop.permute.xlu0 %2030
      %2034 = vset.pattern.permute.xlu0 0
      %2035 = vperm.xlu0 %2034, %v1280
      %v2036 = vpop.permute.xlu0 %2035
      %2039 = vset.pattern.permute.xlu0 0
      %2040 = vperm.xlu0 %2039, %v1282
      %v2041 = vpop.permute.xlu0 %2040
      %2044 = vset.pattern.permute.xlu0 0
      %2045 = vperm.xlu0 %2044, %v1284
      %v2046 = vpop.permute.xlu0 %2045
      %2049 = vset.pattern.permute.xlu0 0
      %2050 = vperm.xlu0 %2049, %v1286
      %v2051 = vpop.permute.xlu0 %2050
      %2054 = vset.pattern.permute.xlu0 0
      %2055 = vperm.xlu0 %2054, %v1288
      %v2056 = vpop.permute.xlu0 %2055
      %v2058 = vmul.f32 %v1901, %v1866
      %v2059 = vmul.f32 %v1906, %v1867
      %v2060 = vmul.f32 %v1911, %v1868
      %v2061 = vmul.f32 %v1916, %v1869
      %v2062 = vmul.f32 %v1921, %v1870
      %v2063 = vmul.f32 %v1926, %v1871
      %v2064 = vmul.f32 %v1931, %v1872
      %v2065 = vmul.f32 %v1936, %v1873
      %v2066 = vmul.f32 %v1941, %v1874
      %v2067 = vmul.f32 %v1946, %v1875
      %v2068 = vmul.f32 %v1951, %v1876
      %v2069 = vmul.f32 %v1956, %v1877
      %v2070 = vmul.f32 %v1961, %v1878
      %v2071 = vmul.f32 %v1966, %v1879
      %v2072 = vmul.f32 %v1971, %v1880
      %v2073 = vmul.f32 %v1976, %v1881
      %v2074 = vmul.f32 %v1981, %v1882
      %v2075 = vmul.f32 %v1986, %v1883
      %v2076 = vmul.f32 %v1991, %v1884
      %v2077 = vmul.f32 %v1996, %v1885
      %v2078 = vmul.f32 %v2001, %v1886
      %v2079 = vmul.f32 %v2006, %v1887
      %v2080 = vmul.f32 %v2011, %v1888
      %v2081 = vmul.f32 %v2016, %v1889
      %v2082 = vmul.f32 %v2021, %v1890
      %v2083 = vmul.f32 %v2026, %v1891
      %v2084 = vmul.f32 %v2031, %v1892
      %v2085 = vmul.f32 %v2036, %v1893
      %v2086 = vmul.f32 %v2041, %v1894
      %v2087 = vmul.f32 %v2046, %v1895
      %v2088 = vmul.f32 %v2051, %v1896
      %v2089 = vmul.f32 %v2056, %v1897
      %2090 = vmatprep.subr.mxu0 0.0
      %2091 = vmatpush1.msra.mxu0 %v551
      %2092 = vmatprep.subr.mxu0 0.0
      %2093 = vmatpush1.msra.mxu0 %v552
      %2094 = vmatprep.subr.mxu0 0.0
      %2095 = vmatpush1.msra.mxu0 %v553
      %2096 = vmatprep.subr.mxu0 0.0
      %2097 = vmatpush1.msra.mxu0 %v554
      %2098 = vmatprep.subr.mxu0 0.0
      %2099 = vmatpush1.msra.mxu0 %v555
      %2100 = vmatprep.subr.mxu0 0.0
      %2101 = vmatpush1.msra.mxu0 %v556
      %2102 = vmatprep.subr.mxu0 0.0
      %2103 = vmatpush1.msra.mxu0 %v557
      %2104 = vmatprep.subr.mxu0 0.0
      %2105 = vmatpush1.msra.mxu0 %v558
      %2106 = vmatprep.subr.mxu0 0.0
      %2107 = vmatpush1.msra.mxu0 %v559
      %2108 = vmatprep.subr.mxu0 0.0
      %2109 = vmatpush1.msra.mxu0 %v560
      %2110 = vmatprep.subr.mxu0 0.0
      %2111 = vmatpush1.msra.mxu0 %v561
      %2112 = vmatprep.subr.mxu0 0.0
      %2113 = vmatpush1.msra.mxu0 %v562
      %2114 = vmatprep.subr.mxu0 0.0
      %2115 = vmatpush1.msra.mxu0 %v563
      %2116 = vmatprep.subr.mxu0 0.0
      %2117 = vmatpush1.msra.mxu0 %v564
      %2118 = vmatprep.subr.mxu0 0.0
      %2119 = vmatpush1.msra.mxu0 %v565
      %2120 = vmatprep.subr.mxu0 0.0
      %2121 = vmatpush1.msra.mxu0 %v566
      %2122 = vmatprep.subr.mxu0 0.0
      %2123 = vmatpush1.msra.mxu0 %v567
      %2124 = vmatprep.subr.mxu0 0.0
      %2125 = vmatpush1.msra.mxu0 %v568
      %2126 = vmatprep.subr.mxu0 0.0
      %2127 = vmatpush1.msra.mxu0 %v569
      %2128 = vmatprep.subr.mxu0 0.0
      %2129 = vmatpush1.msra.mxu0 %v570
      %2130 = vmatprep.subr.mxu0 0.0
      %2131 = vmatpush1.msra.mxu0 %v571
      %2132 = vmatprep.subr.mxu0 0.0
      %2133 = vmatpush1.msra.mxu0 %v572
      %2134 = vmatprep.subr.mxu0 0.0
      %2135 = vmatpush1.msra.mxu0 %v573
      %2136 = vmatprep.subr.mxu0 0.0
      %2137 = vmatpush1.msra.mxu0 %v574
      %2138 = vmatprep.subr.mxu0 0.0
      %2139 = vmatpush1.msra.mxu0 %v575
      %2140 = vmatprep.subr.mxu0 0.0
      %2141 = vmatpush1.msra.mxu0 %v576
      %2142 = vmatprep.subr.mxu0 0.0
      %2143 = vmatpush1.msra.mxu0 %v577
      %2144 = vmatprep.subr.mxu0 0.0
      %2145 = vmatpush1.msra.mxu0 %v578
      %2146 = vmatprep.subr.mxu0 0.0
      %2147 = vmatpush1.msra.mxu0 %v579
      %2148 = vmatprep.subr.mxu0 0.0
      %2149 = vmatpush1.msra.mxu0 %v580
      %2150 = vmatprep.subr.mxu0 0.0
      %2151 = vmatpush1.msra.mxu0 %v581
      %2152 = vmatprep.subr.mxu0 0.0
      %2153 = vmatpush1.msra.mxu0 %v582
      %2154 = vmatprep.mubr.f32.mxu0 %v1516
      %2155 = vmatmul.mubr.f32.gmra.mrb[0].mxu0 %v1514
      %v2156 = vpop.f32.mrb[0].mxu0
      %v2157 = vadd.f32 0.0, %v2156
      %v2158 = vpop.f32.mrb[0].mxu0
      %2159 = vmatprep.mubr.f32.mxu0 %v1520
      %2160 = vmatmul.mubr.f32.gmra.mrb[0].mxu0 %v1518
      %v2161 = vpop.f32.mrb[0].mxu0
      %v2162 = vadd.f32 0.0, %v2161
      %v2163 = vpop.f32.mrb[0].mxu0
      %2164 = vmatprep.mubr.f32.mxu0 %v1524
      %2165 = vmatmul.mubr.f32.gmra.mrb[0].mxu0 %v1522
      %v2166 = vpop.f32.mrb[0].mxu0
      %v2167 = vadd.f32 0.0, %v2166
      %v2168 = vpop.f32.mrb[0].mxu0
      %2169 = vmatprep.mubr.f32.mxu0 %v1528
      %2170 = vmatmul.mubr.f32.gmra.mrb[0].mxu0 %v1526
      %v2171 = vpop.f32.mrb[0].mxu0
      %v2172 = vadd.f32 0.0, %v2171
      %v2173 = vpop.f32.mrb[0].mxu0
      %2174 = vmatprep.mubr.f32.mxu0 %v1532
      %2175 = vmatmul.mubr.f32.gmra.mrb[0].mxu0 %v1530
      %v2176 = vpop.f32.mrb[0].mxu0
      %v2177 = vadd.f32 0.0, %v2176
      %v2178 = vpop.f32.mrb[0].mxu0
      %2179 = vmatprep.mubr.f32.mxu0 %v1536
      %2180 = vmatmul.mubr.f32.gmra.mrb[0].mxu0 %v1534
      %v2181 = vpop.f32.mrb[0].mxu0
      %v2182 = vadd.f32 0.0, %v2181
      %v2183 = vpop.f32.mrb[0].mxu0
      %2184 = vmatprep.mubr.f32.mxu0 %v1540
      %2185 = vmatmul.mubr.f32.gmra.mrb[0].mxu0 %v1538
      %v2186 = vpop.f32.mrb[0].mxu0
      %v2187 = vadd.f32 0.0, %v2186
      %v2188 = vpop.f32.mrb[0].mxu0
      %2189 = vmatprep.mubr.f32.mxu0 %v1544
      %2190 = vmatmul.mubr.f32.gmra.mrb[0].mxu0 %v1542
      %v2191 = vpop.f32.mrb[0].mxu0
      %v2192 = vadd.f32 0.0, %v2191
      %v2193 = vpop.f32.mrb[0].mxu0
      %2194 = vmatprep.mubr.f32.mxu0 %v1548
      %2195 = vmatmul.mubr.f32.gmra.mrb[0].mxu0 %v1546
      %v2196 = vpop.f32.mrb[0].mxu0
      %v2197 = vadd.f32 0.0, %v2196
      %v2198 = vpop.f32.mrb[0].mxu0
      %2199 = vmatprep.mubr.f32.mxu0 %v1552
      %2200 = vmatmul.mubr.f32.gmra.mrb[0].mxu0 %v1550
      %v2201 = vpop.f32.mrb[0].mxu0
      %v2202 = vadd.f32 0.0, %v2201
      %v2203 = vpop.f32.mrb[0].mxu0
      %2204 = vmatprep.mubr.f32.mxu0 %v1556
      %2205 = vmatmul.mubr.f32.gmra.mrb[0].mxu0 %v1554
      %v2206 = vpop.f32.mrb[0].mxu0
      %v2207 = vadd.f32 0.0, %v2206
      %v2208 = vpop.f32.mrb[0].mxu0
      %2209 = vmatprep.mubr.f32.mxu0 %v1560
      %2210 = vmatmul.mubr.f32.gmra.mrb[0].mxu0 %v1558
      %v2211 = vpop.f32.mrb[0].mxu0
      %v2212 = vadd.f32 0.0, %v2211
      %v2213 = vpop.f32.mrb[0].mxu0
      %2214 = vmatprep.mubr.f32.mxu0 %v1564
      %2215 = vmatmul.mubr.f32.gmra.mrb[0].mxu0 %v1562
      %v2216 = vpop.f32.mrb[0].mxu0
      %v2217 = vadd.f32 0.0, %v2216
      %v2218 = vpop.f32.mrb[0].mxu0
      %2219 = vmatprep.mubr.f32.mxu0 %v1568
      %2220 = vmatmul.mubr.f32.gmra.mrb[0].mxu0 %v1566
      %v2221 = vpop.f32.mrb[0].mxu0
      %v2222 = vadd.f32 0.0, %v2221
      %v2223 = vpop.f32.mrb[0].mxu0
      %2224 = vmatprep.mubr.f32.mxu0 %v1572
      %2225 = vmatmul.mubr.f32.gmra.mrb[0].mxu0 %v1570
      %v2226 = vpop.f32.mrb[0].mxu0
      %v2227 = vadd.f32 0.0, %v2226
      %v2228 = vpop.f32.mrb[0].mxu0
      %2229 = vmatprep.mubr.f32.mxu0 %v1576
      %2230 = vmatmul.mubr.f32.gmra.mrb[0].mxu0 %v1574
      %v2231 = vpop.f32.mrb[0].mxu0
      %v2232 = vadd.f32 0.0, %v2231
      %v2233 = vpop.f32.mrb[0].mxu0
      %2234 = vmatprep.mubr.f32.mxu0 %v1580
      %2235 = vmatmul.mubr.f32.gmra.mrb[0].mxu0 %v1578
      %v2236 = vpop.f32.mrb[0].mxu0
      %v2237 = vadd.f32 0.0, %v2236
      %v2238 = vpop.f32.mrb[0].mxu0
      %2239 = vmatprep.mubr.f32.mxu0 %v1584
      %2240 = vmatmul.mubr.f32.gmra.mrb[0].mxu0 %v1582
      %v2241 = vpop.f32.mrb[0].mxu0
      %v2242 = vadd.f32 0.0, %v2241
      %v2243 = vpop.f32.mrb[0].mxu0
      %2244 = vmatprep.mubr.f32.mxu0 %v1588
      %2245 = vmatmul.mubr.f32.gmra.mrb[0].mxu0 %v1586
      %v2246 = vpop.f32.mrb[0].mxu0
      %v2247 = vadd.f32 0.0, %v2246
      %v2248 = vpop.f32.mrb[0].mxu0
      %2249 = vmatprep.mubr.f32.mxu0 %v1592
      %2250 = vmatmul.mubr.f32.gmra.mrb[0].mxu0 %v1590
      %v2251 = vpop.f32.mrb[0].mxu0
      %v2252 = vadd.f32 0.0, %v2251
      %v2253 = vpop.f32.mrb[0].mxu0
      %2254 = vmatprep.mubr.f32.mxu0 %v1596
      %2255 = vmatmul.mubr.f32.gmra.mrb[0].mxu0 %v1594
      %v2256 = vpop.f32.mrb[0].mxu0
      %v2257 = vadd.f32 0.0, %v2256
      %v2258 = vpop.f32.mrb[0].mxu0
      %2259 = vmatprep.mubr.f32.mxu0 %v1600
      %2260 = vmatmul.mubr.f32.gmra.mrb[0].mxu0 %v1598
      %v2261 = vpop.f32.mrb[0].mxu0
      %v2262 = vadd.f32 0.0, %v2261
      %v2263 = vpop.f32.mrb[0].mxu0
      %2264 = vmatprep.mubr.f32.mxu0 %v1604
      %2265 = vmatmul.mubr.f32.gmra.mrb[0].mxu0 %v1602
      %v2266 = vpop.f32.mrb[0].mxu0
      %v2267 = vadd.f32 0.0, %v2266
      %v2268 = vpop.f32.mrb[0].mxu0
      %2269 = vmatprep.mubr.f32.mxu0 %v1608
      %2270 = vmatmul.mubr.f32.gmra.mrb[0].mxu0 %v1606
      %v2271 = vpop.f32.mrb[0].mxu0
      %v2272 = vadd.f32 0.0, %v2271
      %v2273 = vpop.f32.mrb[0].mxu0
      %2274 = vmatprep.mubr.f32.mxu0 %v1612
      %2275 = vmatmul.mubr.f32.gmra.mrb[0].mxu0 %v1610
      %v2276 = vpop.f32.mrb[0].mxu0
      %v2277 = vadd.f32 0.0, %v2276
      %v2278 = vpop.f32.mrb[0].mxu0
      %2279 = vmatprep.mubr.f32.mxu0 %v1616
      %2280 = vmatmul.mubr.f32.gmra.mrb[0].mxu0 %v1614
      %v2281 = vpop.f32.mrb[0].mxu0
      %v2282 = vadd.f32 0.0, %v2281
      %v2283 = vpop.f32.mrb[0].mxu0
      %2284 = vmatprep.mubr.f32.mxu0 %v1620
      %2285 = vmatmul.mubr.f32.gmra.mrb[0].mxu0 %v1618
      %v2286 = vpop.f32.mrb[0].mxu0
      %v2287 = vadd.f32 0.0, %v2286
      %v2288 = vpop.f32.mrb[0].mxu0
      %2289 = vmatprep.mubr.f32.mxu0 %v1624
      %2290 = vmatmul.mubr.f32.gmra.mrb[0].mxu0 %v1622
      %v2291 = vpop.f32.mrb[0].mxu0
      %v2292 = vadd.f32 0.0, %v2291
      %v2293 = vpop.f32.mrb[0].mxu0
      %2294 = vmatprep.mubr.f32.mxu0 %v1628
      %2295 = vmatmul.mubr.f32.gmra.mrb[0].mxu0 %v1626
      %v2296 = vpop.f32.mrb[0].mxu0
      %v2297 = vadd.f32 0.0, %v2296
      %v2298 = vpop.f32.mrb[0].mxu0
      %2299 = vmatprep.mubr.f32.mxu0 %v1632
      %2300 = vmatmul.mubr.f32.gmra.mrb[0].mxu0 %v1630
      %v2301 = vpop.f32.mrb[0].mxu0
      %v2302 = vadd.f32 0.0, %v2301
      %v2303 = vpop.f32.mrb[0].mxu0
      %2304 = vmatprep.mubr.f32.mxu0 %v1636
      %2305 = vmatmul.mubr.f32.gmra.mrb[0].mxu0 %v1634
      %v2306 = vpop.f32.mrb[0].mxu0
      %v2307 = vadd.f32 0.0, %v2306
      %v2308 = vpop.f32.mrb[0].mxu0
      %2309 = vmatprep.mubr.f32.mxu0 %v1640
      %2310 = vmatmul.mubr.f32.gmra.mrb[0].mxu0 %v1638
      %v2311 = vpop.f32.mrb[0].mxu0
      %v2312 = vadd.f32 0.0, %v2311
      %v2313 = vpop.f32.mrb[0].mxu0
      %2314 = vdwg.mxu0
      %v2315 = vadd.f32 %v2058, %v2157
      %v2316 = vadd.f32 %v2059, %v2162
      %v2317 = vadd.f32 %v2060, %v2167
      %v2318 = vadd.f32 %v2061, %v2172
      %v2319 = vadd.f32 %v2062, %v2177
      %v2320 = vadd.f32 %v2063, %v2182
      %v2321 = vadd.f32 %v2064, %v2187
      %v2322 = vadd.f32 %v2065, %v2192
      %v2323 = vadd.f32 %v2066, %v2197
      %v2324 = vadd.f32 %v2067, %v2202
      %v2325 = vadd.f32 %v2068, %v2207
      %v2326 = vadd.f32 %v2069, %v2212
      %v2327 = vadd.f32 %v2070, %v2217
      %v2328 = vadd.f32 %v2071, %v2222
      %v2329 = vadd.f32 %v2072, %v2227
      %v2330 = vadd.f32 %v2073, %v2232
      %v2331 = vadd.f32 %v2074, %v2237
      %v2332 = vadd.f32 %v2075, %v2242
      %v2333 = vadd.f32 %v2076, %v2247
      %v2334 = vadd.f32 %v2077, %v2252
      %v2335 = vadd.f32 %v2078, %v2257
      %v2336 = vadd.f32 %v2079, %v2262
      %v2337 = vadd.f32 %v2080, %v2267
      %v2338 = vadd.f32 %v2081, %v2272
      %v2339 = vadd.f32 %v2082, %v2277
      %v2340 = vadd.f32 %v2083, %v2282
      %v2341 = vadd.f32 %v2084, %v2287
      %v2342 = vadd.f32 %v2085, %v2292
      %v2343 = vadd.f32 %v2086, %v2297
      %v2344 = vadd.f32 %v2087, %v2302
      %v2345 = vadd.f32 %v2088, %v2307
      %v2346 = vadd.f32 %v2089, %v2312
      %2347 = vst.msk [vmem:[#allocation5] sm:$0xff] %vm583, %v2315
      %2348 = vst.msk [vmem:[#allocation5 + $0x8] sm:$0xff] %vm583, %v2316
      %2349 = vst.msk [vmem:[#allocation5 + $0x10] sm:$0xff] %vm583, %v2317
      %2350 = vst.msk [vmem:[#allocation5 + $0x18] sm:$0xff] %vm583, %v2318
      %2351 = vst.msk [vmem:[#allocation5 + $0x20] sm:$0xff] %vm583, %v2319
      %2352 = vst.msk [vmem:[#allocation5 + $0x28] sm:$0xff] %vm583, %v2320
      %2353 = vst.msk [vmem:[#allocation5 + $0x30] sm:$0xff] %vm583, %v2321
      %2354 = vst.msk [vmem:[#allocation5 + $0x38] sm:$0xff] %vm583, %v2322
      %2355 = vst.msk [vmem:[#allocation5 + $0x40] sm:$0xff] %vm583, %v2323
      %2356 = vst.msk [vmem:[#allocation5 + $0x48] sm:$0xff] %vm583, %v2324
      %2357 = vst.msk [vmem:[#allocation5 + $0x50] sm:$0xff] %vm583, %v2325
      %2358 = vst.msk [vmem:[#allocation5 + $0x58] sm:$0xff] %vm583, %v2326
      %2359 = vst.msk [vmem:[#allocation5 + $0x60] sm:$0xff] %vm583, %v2327
      %2360 = vst.msk [vmem:[#allocation5 + $0x68] sm:$0xff] %vm583, %v2328
      %2361 = vst.msk [vmem:[#allocation5 + $0x70] sm:$0xff] %vm583, %v2329
      %2362 = vst.msk [vmem:[#allocation5 + $0x78] sm:$0xff] %vm583, %v2330
      %2363 = vst.msk [vmem:[#allocation5 + $0x80] sm:$0xff] %vm583, %v2331
      %2364 = vst.msk [vmem:[#allocation5 + $0x88] sm:$0xff] %vm583, %v2332
      %2365 = vst.msk [vmem:[#allocation5 + $0x90] sm:$0xff] %vm583, %v2333
      %2366 = vst.msk [vmem:[#allocation5 + $0x98] sm:$0xff] %vm583, %v2334
      %2367 = vst.msk [vmem:[#allocation5 + $0xa0] sm:$0xff] %vm583, %v2335
      %2368 = vst.msk [vmem:[#allocation5 + $0xa8] sm:$0xff] %vm583, %v2336
      %2369 = vst.msk [vmem:[#allocation5 + $0xb0] sm:$0xff] %vm583, %v2337
      %2370 = vst.msk [vmem:[#allocation5 + $0xb8] sm:$0xff] %vm583, %v2338
      %2371 = vst.msk [vmem:[#allocation5 + $0xc0] sm:$0xff] %vm583, %v2339
      %2372 = vst.msk [vmem:[#allocation5 + $0xc8] sm:$0xff] %vm583, %v2340
      %2373 = vst.msk [vmem:[#allocation5 + $0xd0] sm:$0xff] %vm583, %v2341
      %2374 = vst.msk [vmem:[#allocation5 + $0xd8] sm:$0xff] %vm583, %v2342
      %2375 = vst.msk [vmem:[#allocation5 + $0xe0] sm:$0xff] %vm583, %v2343
      %2376 = vst.msk [vmem:[#allocation5 + $0xe8] sm:$0xff] %vm583, %v2344
      %2377 = vst.msk [vmem:[#allocation5 + $0xf0] sm:$0xff] %vm583, %v2345
      %2378 = vst.msk [vmem:[#allocation5 + $0xf8] sm:$0xff] %vm583, %v2346
      %2379 = vst.msk [vmem:[#allocation3] sm:$0xff] %vm1833, %v1161
      %2380 = vst.msk [vmem:[#allocation3 + $0x8] sm:$0xff] %vm1833, %v1162
      %2381 = vst.msk [vmem:[#allocation3 + $0x10] sm:$0xff] %vm1833, %v1163
      %2382 = vst.msk [vmem:[#allocation3 + $0x18] sm:$0xff] %vm1833, %v1164
      %2383 = vst.msk [vmem:[#allocation3 + $0x20] sm:$0xff] %vm1833, %v1165
      %2384 = vst.msk [vmem:[#allocation3 + $0x28] sm:$0xff] %vm1833, %v1166
      %2385 = vst.msk [vmem:[#allocation3 + $0x30] sm:$0xff] %vm1833, %v1167
      %2386 = vst.msk [vmem:[#allocation3 + $0x38] sm:$0xff] %vm1833, %v1168
      %2387 = vst.msk [vmem:[#allocation3 + $0x40] sm:$0xff] %vm1833, %v1169
      %2388 = vst.msk [vmem:[#allocation3 + $0x48] sm:$0xff] %vm1833, %v1170
      %2389 = vst.msk [vmem:[#allocation3 + $0x50] sm:$0xff] %vm1833, %v1171
      %2390 = vst.msk [vmem:[#allocation3 + $0x58] sm:$0xff] %vm1833, %v1172
      %2391 = vst.msk [vmem:[#allocation3 + $0x60] sm:$0xff] %vm1833, %v1173
      %2392 = vst.msk [vmem:[#allocation3 + $0x68] sm:$0xff] %vm1833, %v1174
      %2393 = vst.msk [vmem:[#allocation3 + $0x70] sm:$0xff] %vm1833, %v1175
      %2394 = vst.msk [vmem:[#allocation3 + $0x78] sm:$0xff] %vm1833, %v1176
      %2395 = vst.msk [vmem:[#allocation3 + $0x80] sm:$0xff] %vm1833, %v1177
      %2396 = vst.msk [vmem:[#allocation3 + $0x88] sm:$0xff] %vm1833, %v1178
      %2397 = vst.msk [vmem:[#allocation3 + $0x90] sm:$0xff] %vm1833, %v1179
      %2398 = vst.msk [vmem:[#allocation3 + $0x98] sm:$0xff] %vm1833, %v1180
      %2399 = vst.msk [vmem:[#allocation3 + $0xa0] sm:$0xff] %vm1833, %v1181
      %2400 = vst.msk [vmem:[#allocation3 + $0xa8] sm:$0xff] %vm1833, %v1182
      %2401 = vst.msk [vmem:[#allocation3 + $0xb0] sm:$0xff] %vm1833, %v1183
      %2402 = vst.msk [vmem:[#allocation3 + $0xb8] sm:$0xff] %vm1833, %v1184
      %2403 = vst.msk [vmem:[#allocation3 + $0xc0] sm:$0xff] %vm1833, %v1185
      %2404 = vst.msk [vmem:[#allocation3 + $0xc8] sm:$0xff] %vm1833, %v1186
      %2405 = vst.msk [vmem:[#allocation3 + $0xd0] sm:$0xff] %vm1833, %v1187
      %2406 = vst.msk [vmem:[#allocation3 + $0xd8] sm:$0xff] %vm1833, %v1188
      %2407 = vst.msk [vmem:[#allocation3 + $0xe0] sm:$0xff] %vm1833, %v1189
      %2408 = vst.msk [vmem:[#allocation3 + $0xe8] sm:$0xff] %vm1833, %v1190
      %2409 = vst.msk [vmem:[#allocation3 + $0xf0] sm:$0xff] %vm1833, %v1191
      %2410 = vst.msk [vmem:[#allocation3 + $0xf8] sm:$0xff] %vm1833, %v1192
      // Predicated region
      $region37: #{tpu_custom_call.1} parent=31 // pred_check
        %p2411 = pneg %p289
      $region38: #{tpu_custom_call.1} parent=31 // pred_check_branch
        %2413 = sbr.rel (%p2411) target = $region40
      $region39: #{tpu_custom_call.1} parent=31 // pred_region
        %v2414 = vld [vmem:[#allocation4] sm:$0xff]
        %v2415 = vld [vmem:[#allocation4 + $0x8] sm:$0xff]
        %v2416 = vld [vmem:[#allocation4 + $0x10] sm:$0xff]
        %v2417 = vld [vmem:[#allocation4 + $0x18] sm:$0xff]
        %v2418 = vld [vmem:[#allocation4 + $0x20] sm:$0xff]
        %v2419 = vld [vmem:[#allocation4 + $0x28] sm:$0xff]
        %v2420 = vld [vmem:[#allocation4 + $0x30] sm:$0xff]
        %v2421 = vld [vmem:[#allocation4 + $0x38] sm:$0xff]
        %v2422 = vld [vmem:[#allocation4 + $0x40] sm:$0xff]
        %v2423 = vld [vmem:[#allocation4 + $0x48] sm:$0xff]
        %v2424 = vld [vmem:[#allocation4 + $0x50] sm:$0xff]
        %v2425 = vld [vmem:[#allocation4 + $0x58] sm:$0xff]
        %v2426 = vld [vmem:[#allocation4 + $0x60] sm:$0xff]
        %v2427 = vld [vmem:[#allocation4 + $0x68] sm:$0xff]
        %v2428 = vld [vmem:[#allocation4 + $0x70] sm:$0xff]
        %v2429 = vld [vmem:[#allocation4 + $0x78] sm:$0xff]
        %v2430 = vld [vmem:[#allocation4 + $0x80] sm:$0xff]
        %v2431 = vld [vmem:[#allocation4 + $0x88] sm:$0xff]
        %v2432 = vld [vmem:[#allocation4 + $0x90] sm:$0xff]
        %v2433 = vld [vmem:[#allocation4 + $0x98] sm:$0xff]
        %v2434 = vld [vmem:[#allocation4 + $0xa0] sm:$0xff]
        %v2435 = vld [vmem:[#allocation4 + $0xa8] sm:$0xff]
        %v2436 = vld [vmem:[#allocation4 + $0xb0] sm:$0xff]
        %v2437 = vld [vmem:[#allocation4 + $0xb8] sm:$0xff]
        %v2438 = vld [vmem:[#allocation4 + $0xc0] sm:$0xff]
        %v2439 = vld [vmem:[#allocation4 + $0xc8] sm:$0xff]
        %v2440 = vld [vmem:[#allocation4 + $0xd0] sm:$0xff]
        %v2441 = vld [vmem:[#allocation4 + $0xd8] sm:$0xff]
        %v2442 = vld [vmem:[#allocation4 + $0xe0] sm:$0xff]
        %v2443 = vld [vmem:[#allocation4 + $0xe8] sm:$0xff]
        %v2444 = vld [vmem:[#allocation4 + $0xf0] sm:$0xff]
        %v2445 = vld [vmem:[#allocation4 + $0xf8] sm:$0xff]
        %v2446 = vrcp.pop %v2414
        %v2447 = vrcp.pop %v2415
        %v2448 = vrcp.pop %v2416
        %v2449 = vrcp.pop %v2417
        %v2450 = vrcp.pop %v2418
        %v2451 = vrcp.pop %v2419
        %v2452 = vrcp.pop %v2420
        %v2453 = vrcp.pop %v2421
        %v2454 = vrcp.pop %v2422
        %v2455 = vrcp.pop %v2423
        %v2456 = vrcp.pop %v2424
        %v2457 = vrcp.pop %v2425
        %v2458 = vrcp.pop %v2426
        %v2459 = vrcp.pop %v2427
        %v2460 = vrcp.pop %v2428
        %v2461 = vrcp.pop %v2429
        %v2462 = vrcp.pop %v2430
        %v2463 = vrcp.pop %v2431
        %v2464 = vrcp.pop %v2432
        %v2465 = vrcp.pop %v2433
        %v2466 = vrcp.pop %v2434
        %v2467 = vrcp.pop %v2435
        %v2468 = vrcp.pop %v2436
        %v2469 = vrcp.pop %v2437
        %v2470 = vrcp.pop %v2438
        %v2471 = vrcp.pop %v2439
        %v2472 = vrcp.pop %v2440
        %v2473 = vrcp.pop %v2441
        %v2474 = vrcp.pop %v2442
        %v2475 = vrcp.pop %v2443
        %v2476 = vrcp.pop %v2444
        %v2477 = vrcp.pop %v2445
        %v2478 = vld [vmem:[#allocation5] sm:$0xff]
        %v2479 = vld [vmem:[#allocation5 + $0x8] sm:$0xff]
        %v2480 = vld [vmem:[#allocation5 + $0x10] sm:$0xff]
        %v2481 = vld [vmem:[#allocation5 + $0x18] sm:$0xff]
        %v2482 = vld [vmem:[#allocation5 + $0x20] sm:$0xff]
        %v2483 = vld [vmem:[#allocation5 + $0x28] sm:$0xff]
        %v2484 = vld [vmem:[#allocation5 + $0x30] sm:$0xff]
        %v2485 = vld [vmem:[#allocation5 + $0x38] sm:$0xff]
        %v2486 = vld [vmem:[#allocation5 + $0x40] sm:$0xff]
        %v2487 = vld [vmem:[#allocation5 + $0x48] sm:$0xff]
        %v2488 = vld [vmem:[#allocation5 + $0x50] sm:$0xff]
        %v2489 = vld [vmem:[#allocation5 + $0x58] sm:$0xff]
        %v2490 = vld [vmem:[#allocation5 + $0x60] sm:$0xff]
        %v2491 = vld [vmem:[#allocation5 + $0x68] sm:$0xff]
        %v2492 = vld [vmem:[#allocation5 + $0x70] sm:$0xff]
        %v2493 = vld [vmem:[#allocation5 + $0x78] sm:$0xff]
        %v2494 = vld [vmem:[#allocation5 + $0x80] sm:$0xff]
        %v2495 = vld [vmem:[#allocation5 + $0x88] sm:$0xff]
        %v2496 = vld [vmem:[#allocation5 + $0x90] sm:$0xff]
        %v2497 = vld [vmem:[#allocation5 + $0x98] sm:$0xff]
        %v2498 = vld [vmem:[#allocation5 + $0xa0] sm:$0xff]
        %v2499 = vld [vmem:[#allocation5 + $0xa8] sm:$0xff]
        %v2500 = vld [vmem:[#allocation5 + $0xb0] sm:$0xff]
        %v2501 = vld [vmem:[#allocation5 + $0xb8] sm:$0xff]
        %v2502 = vld [vmem:[#allocation5 + $0xc0] sm:$0xff]
        %v2503 = vld [vmem:[#allocation5 + $0xc8] sm:$0xff]
        %v2504 = vld [vmem:[#allocation5 + $0xd0] sm:$0xff]
        %v2505 = vld [vmem:[#allocation5 + $0xd8] sm:$0xff]
        %v2506 = vld [vmem:[#allocation5 + $0xe0] sm:$0xff]
        %v2507 = vld [vmem:[#allocation5 + $0xe8] sm:$0xff]
        %v2508 = vld [vmem:[#allocation5 + $0xf0] sm:$0xff]
        %v2509 = vld [vmem:[#allocation5 + $0xf8] sm:$0xff]
        %2511 = vset.pattern.permute.xlu0 0
        %2512 = vperm.xlu0 %2511, %v2446
        %v2513 = vpop.permute.xlu0 %2512
        %2516 = vset.pattern.permute.xlu0 0
        %2517 = vperm.xlu0 %2516, %v2447
        %v2518 = vpop.permute.xlu0 %2517
        %2521 = vset.pattern.permute.xlu0 0
        %2522 = vperm.xlu0 %2521, %v2448
        %v2523 = vpop.permute.xlu0 %2522
        %2526 = vset.pattern.permute.xlu0 0
        %2527 = vperm.xlu0 %2526, %v2449
        %v2528 = vpop.permute.xlu0 %2527
        %2531 = vset.pattern.permute.xlu0 0
        %2532 = vperm.xlu0 %2531, %v2450
        %v2533 = vpop.permute.xlu0 %2532
        %2536 = vset.pattern.permute.xlu0 0
        %2537 = vperm.xlu0 %2536, %v2451
        %v2538 = vpop.permute.xlu0 %2537
        %2541 = vset.pattern.permute.xlu0 0
        %2542 = vperm.xlu0 %2541, %v2452
        %v2543 = vpop.permute.xlu0 %2542
        %2546 = vset.pattern.permute.xlu0 0
        %2547 = vperm.xlu0 %2546, %v2453
        %v2548 = vpop.permute.xlu0 %2547
        %2551 = vset.pattern.permute.xlu0 0
        %2552 = vperm.xlu0 %2551, %v2454
        %v2553 = vpop.permute.xlu0 %2552
        %2556 = vset.pattern.permute.xlu0 0
        %2557 = vperm.xlu0 %2556, %v2455
        %v2558 = vpop.permute.xlu0 %2557
        %2561 = vset.pattern.permute.xlu0 0
        %2562 = vperm.xlu0 %2561, %v2456
        %v2563 = vpop.permute.xlu0 %2562
        %2566 = vset.pattern.permute.xlu0 0
        %2567 = vperm.xlu0 %2566, %v2457
        %v2568 = vpop.permute.xlu0 %2567
        %2571 = vset.pattern.permute.xlu0 0
        %2572 = vperm.xlu0 %2571, %v2458
        %v2573 = vpop.permute.xlu0 %2572
        %2576 = vset.pattern.permute.xlu0 0
        %2577 = vperm.xlu0 %2576, %v2459
        %v2578 = vpop.permute.xlu0 %2577
        %2581 = vset.pattern.permute.xlu0 0
        %2582 = vperm.xlu0 %2581, %v2460
        %v2583 = vpop.permute.xlu0 %2582
        %2586 = vset.pattern.permute.xlu0 0
        %2587 = vperm.xlu0 %2586, %v2461
        %v2588 = vpop.permute.xlu0 %2587
        %2591 = vset.pattern.permute.xlu0 0
        %2592 = vperm.xlu0 %2591, %v2462
        %v2593 = vpop.permute.xlu0 %2592
        %2596 = vset.pattern.permute.xlu0 0
        %2597 = vperm.xlu0 %2596, %v2463
        %v2598 = vpop.permute.xlu0 %2597
        %2601 = vset.pattern.permute.xlu0 0
        %2602 = vperm.xlu0 %2601, %v2464
        %v2603 = vpop.permute.xlu0 %2602
        %2606 = vset.pattern.permute.xlu0 0
        %2607 = vperm.xlu0 %2606, %v2465
        %v2608 = vpop.permute.xlu0 %2607
        %2611 = vset.pattern.permute.xlu0 0
        %2612 = vperm.xlu0 %2611, %v2466
        %v2613 = vpop.permute.xlu0 %2612
        %2616 = vset.pattern.permute.xlu0 0
        %2617 = vperm.xlu0 %2616, %v2467
        %v2618 = vpop.permute.xlu0 %2617
        %2621 = vset.pattern.permute.xlu0 0
        %2622 = vperm.xlu0 %2621, %v2468
        %v2623 = vpop.permute.xlu0 %2622
        %2626 = vset.pattern.permute.xlu0 0
        %2627 = vperm.xlu0 %2626, %v2469
        %v2628 = vpop.permute.xlu0 %2627
        %2631 = vset.pattern.permute.xlu0 0
        %2632 = vperm.xlu0 %2631, %v2470
        %v2633 = vpop.permute.xlu0 %2632
        %2636 = vset.pattern.permute.xlu0 0
        %2637 = vperm.xlu0 %2636, %v2471
        %v2638 = vpop.permute.xlu0 %2637
        %2641 = vset.pattern.permute.xlu0 0
        %2642 = vperm.xlu0 %2641, %v2472
        %v2643 = vpop.permute.xlu0 %2642
        %2646 = vset.pattern.permute.xlu0 0
        %2647 = vperm.xlu0 %2646, %v2473
        %v2648 = vpop.permute.xlu0 %2647
        %2651 = vset.pattern.permute.xlu0 0
        %2652 = vperm.xlu0 %2651, %v2474
        %v2653 = vpop.permute.xlu0 %2652
        %2656 = vset.pattern.permute.xlu0 0
        %2657 = vperm.xlu0 %2656, %v2475
        %v2658 = vpop.permute.xlu0 %2657
        %2661 = vset.pattern.permute.xlu0 0
        %2662 = vperm.xlu0 %2661, %v2476
        %v2663 = vpop.permute.xlu0 %2662
        %2666 = vset.pattern.permute.xlu0 0
        %2667 = vperm.xlu0 %2666, %v2477
        %v2668 = vpop.permute.xlu0 %2667
        %v2670 = vmul.f32 %v2478, %v2513
        %v2671 = vmul.f32 %v2479, %v2518
        %v2672 = vmul.f32 %v2480, %v2523
        %v2673 = vmul.f32 %v2481, %v2528
        %v2674 = vmul.f32 %v2482, %v2533
        %v2675 = vmul.f32 %v2483, %v2538
        %v2676 = vmul.f32 %v2484, %v2543
        %v2677 = vmul.f32 %v2485, %v2548
        %v2678 = vmul.f32 %v2486, %v2553
        %v2679 = vmul.f32 %v2487, %v2558
        %v2680 = vmul.f32 %v2488, %v2563
        %v2681 = vmul.f32 %v2489, %v2568
        %v2682 = vmul.f32 %v2490, %v2573
        %v2683 = vmul.f32 %v2491, %v2578
        %v2684 = vmul.f32 %v2492, %v2583
        %v2685 = vmul.f32 %v2493, %v2588
        %v2686 = vmul.f32 %v2494, %v2593
        %v2687 = vmul.f32 %v2495, %v2598
        %v2688 = vmul.f32 %v2496, %v2603
        %v2689 = vmul.f32 %v2497, %v2608
        %v2690 = vmul.f32 %v2498, %v2613
        %v2691 = vmul.f32 %v2499, %v2618
        %v2692 = vmul.f32 %v2500, %v2623
        %v2693 = vmul.f32 %v2501, %v2628
        %v2694 = vmul.f32 %v2502, %v2633
        %v2695 = vmul.f32 %v2503, %v2638
        %v2696 = vmul.f32 %v2504, %v2643
        %v2697 = vmul.f32 %v2505, %v2648
        %v2698 = vmul.f32 %v2506, %v2653
        %v2699 = vmul.f32 %v2507, %v2658
        %v2700 = vmul.f32 %v2508, %v2663
        %v2701 = vmul.f32 %v2509, %v2668
        %2702 = vst.msk [vmem:[%s287] sm:$0xff] %vm583, %v2670
        %2703 = vst.msk [vmem:[%s287 + $0x8] sm:$0xff] %vm583, %v2671
        %2704 = vst.msk [vmem:[%s287 + $0x10] sm:$0xff] %vm583, %v2672
        %2705 = vst.msk [vmem:[%s287 + $0x18] sm:$0xff] %vm583, %v2673
        %2706 = vst.msk [vmem:[%s287 + $0x20] sm:$0xff] %vm583, %v2674
        %2707 = vst.msk [vmem:[%s287 + $0x28] sm:$0xff] %vm583, %v2675
        %2708 = vst.msk [vmem:[%s287 + $0x30] sm:$0xff] %vm583, %v2676
        %2709 = vst.msk [vmem:[%s287 + $0x38] sm:$0xff] %vm583, %v2677
        %2710 = vst.msk [vmem:[%s287 + $0x40] sm:$0xff] %vm583, %v2678
        %2711 = vst.msk [vmem:[%s287 + $0x48] sm:$0xff] %vm583, %v2679
        %2712 = vst.msk [vmem:[%s287 + $0x50] sm:$0xff] %vm583, %v2680
        %2713 = vst.msk [vmem:[%s287 + $0x58] sm:$0xff] %vm583, %v2681
        %2714 = vst.msk [vmem:[%s287 + $0x60] sm:$0xff] %vm583, %v2682
        %2715 = vst.msk [vmem:[%s287 + $0x68] sm:$0xff] %vm583, %v2683
        %2716 = vst.msk [vmem:[%s287 + $0x70] sm:$0xff] %vm583, %v2684
        %2717 = vst.msk [vmem:[%s287 + $0x78] sm:$0xff] %vm583, %v2685
        %2718 = vst.msk [vmem:[%s287 + $0x80] sm:$0xff] %vm583, %v2686
        %2719 = vst.msk [vmem:[%s287 + $0x88] sm:$0xff] %vm583, %v2687
        %2720 = vst.msk [vmem:[%s287 + $0x90] sm:$0xff] %vm583, %v2688
        %2721 = vst.msk [vmem:[%s287 + $0x98] sm:$0xff] %vm583, %v2689
        %2722 = vst.msk [vmem:[%s287 + $0xa0] sm:$0xff] %vm583, %v2690
        %2723 = vst.msk [vmem:[%s287 + $0xa8] sm:$0xff] %vm583, %v2691
        %2724 = vst.msk [vmem:[%s287 + $0xb0] sm:$0xff] %vm583, %v2692
        %2725 = vst.msk [vmem:[%s287 + $0xb8] sm:$0xff] %vm583, %v2693
        %2726 = vst.msk [vmem:[%s287 + $0xc0] sm:$0xff] %vm583, %v2694
        %2727 = vst.msk [vmem:[%s287 + $0xc8] sm:$0xff] %vm583, %v2695
        %2728 = vst.msk [vmem:[%s287 + $0xd0] sm:$0xff] %vm583, %v2696
        %2729 = vst.msk [vmem:[%s287 + $0xd8] sm:$0xff] %vm583, %v2697
        %2730 = vst.msk [vmem:[%s287 + $0xe0] sm:$0xff] %vm583, %v2698
        %2731 = vst.msk [vmem:[%s287 + $0xe8] sm:$0xff] %vm583, %v2699
        %2732 = vst.msk [vmem:[%s287 + $0xf0] sm:$0xff] %vm583, %v2700
        %2733 = vst.msk [vmem:[%s287 + $0xf8] sm:$0xff] %vm583, %v2701
      $region40: #{tpu_custom_call.1} parent=31 // pred_fallthru
        _
      %s2734 = smul.u32 32, %s20
      %p2735 = scmp.lt.s32.totalorder %s19, 3
      %s2736 = scalar_select %p2735, %s19, 3
      %p2737 = scmp.lt.s32.totalorder %s2734, 31
      %s2738 = scalar_select %p2737, %s2734, 31
      %s2739 = smul.addr %s2736, 32
      %s2740 = sadd.s32 %s2738, %s2739
      %s2741 = smul.addr %s2740, 8
      %s2742 = scalar_lea.vmem %s3, %s2741
      // Predicated region
      $region41: #{tpu_custom_call.1} parent=31 // pred_check
        %p2743 = pneg %p137
      $region42: #{tpu_custom_call.1} parent=31 // pred_check_branch
        %2745 = sbr.rel (%p2743) target = $region44
      $region43: #{tpu_custom_call.1} parent=31 // pred_region
        %s2746 = smul.u32 32, %s20
      $region44: #{tpu_custom_call.1} parent=31 // pred_fallthru
        _
    $region32: #{tpu_custom_call.1} parent=5 // pred_fallthru
      _
    %p2747 = scmp.le.s32.totalorder 2, %s9
    // Predicated region
    $region45: #{tpu_custom_call.1} parent=5 // pred_check
      %p2748 = pneg %p2747
    $region46: #{tpu_custom_call.1} parent=5 // pred_check_branch
      %2750 = sbr.rel (%p2748) target = $region48
    $region47: #{tpu_custom_call.1} parent=5 // pred_region
      %s2751 = ssub.s32 %s9, 2
      // Predicated region
      $region49: #{tpu_custom_call.1} parent=47 // pred_check
        %p2752 = pneg %p143
      $region50: #{tpu_custom_call.1} parent=47 // pred_check_branch
        %2754 = sbr.rel (%p2752) target = $region52
      $region51: #{tpu_custom_call.1} parent=47 // pred_region
        %s2755 = smul.u32 32, %s23
        %p2756 = scmp.lt.s32.totalorder %s22, 3
        %s2757 = scalar_select %p2756, %s22, 3
        %p2758 = scmp.lt.s32.totalorder %s2755, 31
        %s2759 = scalar_select %p2758, %s2755, 31
        %s2760 = smul.addr %s2757, 32
        %s2761 = sadd.s32 %s2759, %s2760
        %s2762 = smul.addr %s2761, 8
        %s2763 = scalar_lea.vmem %s3, %s2762
      $region52: #{tpu_custom_call.1} parent=47 // pred_fallthru
        _
    $region48: #{tpu_custom_call.1} parent=5 // pred_fallthru
      _
  $region6: #{tpu_custom_call.1} parent=0 // loop_footer
    %s13 = sadd.s32 1, %s9
  $region7: #{tpu_custom_call.1} parent=0 // loop_footer_branch
    %8 = sbr.rel target = $region3
  $region8: #{tpu_custom_call.1} parent=0 // loop_exit
    _

</llo_original>
